<compile_context>
chip_gen: v7x
topology: tpu7x:2x2x1
jax: 0.10.0
libtpu: 0.0.40
codegen_flags: <defaults>
</compile_context>

<pallas_src>
import functools

import jax
import jax.numpy as jnp
from jax.experimental import pallas as pl
from jax.experimental.pallas import tpu as pltpu


def _round_up(x, m):
    return ((x + m - 1) // m) * m


def _pad2d(a, rows, cols):
    return jnp.pad(a, ((0, rows - a.shape[0]), (0, cols - a.shape[1])))


def _has_bf16_vpu():
    """True on parts with a bf16 VALU (v6e / v7x); otherwise keep the f32 epilogue."""
    try:
        kind = jax.devices()[0].device_kind.lower()
    except Exception:
        return False
    return any(t in kind for t in ("v6", "v7", "tpu7", "trillium"))


def mlp_kernel(x_ref, w1_ref, b1_ref, w2_ref, b2_ref, w3_ref, b3_ref, o_ref):
    """One batch tile of Flatten->Linear->ReLU->Linear->ReLU->Linear.

    MXU matmuls in bf16 with f32 accumulation; the bias/ReLU epilogue runs in the
    dtype the biases were prepared in (bf16 on bf16-VPU parts, f32 on v5e).
    """
    x = x_ref[...].astype(jnp.bfloat16)
    # Layer 1
    h = jnp.dot(x, w1_ref[...], preferred_element_type=jnp.float32)
    h = jnp.maximum(h.astype(b1_ref.dtype) + b1_ref[...], 0).astype(jnp.bfloat16)
    # Layer 2
    h = jnp.dot(h, w2_ref[...], preferred_element_type=jnp.float32)
    h = jnp.maximum(h.astype(b2_ref.dtype) + b2_ref[...], 0).astype(jnp.bfloat16)
    # Layer 3: logits (padded lanes carry exact zeros); final bias add in f32.
    out = jnp.dot(h, w3_ref[...], preferred_element_type=jnp.float32) + b3_ref[...]
    o_ref[...] = out.astype(o_ref.dtype)


def prepare_params(params, epilogue_dtype=None):
    """One-time parameter preparation (call once at init, reuse every forward).

    Zero-pads every feature dim to a multiple of 128 and casts weights to bf16.
    Biases 1/2 are stored in the epilogue dtype (bf16 on bf16-VPU parts, else f32);
    the final bias stays f32 (added to the f32 accumulator).
    Returns (prepared_params, out_features).
    """
    if epilogue_dtype is None:
        epilogue_dtype = jnp.bfloat16 if _has_bf16_vpu() else jnp.float32
    w1, b1, w2, b2, w3, b3 = params
    IN, H1 = w1.shape
    H2, OUT = w3.shape
    K1, K2, K3, NO = (_round_up(d, 128) for d in (IN, H1, H2, OUT))

    w1p = _pad2d(w1, K1, K2).astype(jnp.bfloat16)
    w2p = _pad2d(w2, K2, K3).astype(jnp.bfloat16)
    w3p = _pad2d(w3, K3, NO).astype(jnp.bfloat16)
    b1p = _pad2d(b1, 1, K2).astype(epilogue_dtype)
    b2p = _pad2d(b2, 1, K3).astype(epilogue_dtype)
    b3p = _pad2d(b3, 1, NO).astype(jnp.float32)
    return (w1p, b1p, w2p, b2p, w3p, b3p), OUT


def _batch_tiling(B):
    """Pick (TB, Bp): batch tile rows and padded batch size."""
    Bp = _round_up(max(B, 1), 16)
    if Bp < 128:
        return Bp, Bp  # tiny batch: single step, block == full array
    # Tiles up to 512 rows amortize the ~0.35us/step grid overhead; at least 2
    # grid steps so both TensorCores on 2-TC parts (v7x) get work.
    n_steps = max(2, pl.cdiv(Bp, 512))
    TB = _round_up(pl.cdiv(Bp, n_steps), 16)
    Bp = _round_up(Bp, TB)
    return TB, Bp


@functools.partial(jax.jit, static_argnames=("out_features",))
def baseline_net_forward(x_nchw, prepared_params, out_features=2):
    """x_nchw: (B, 2, 14, 14) float32. Returns logits (B, out_features) float32."""
    w1p, b1p, w2p, b2p, w3p, b3p = prepared_params
    K1, K2 = w1p.shape
    K3 = w2p.shape[1]
    NO = w3p.shape[1]
    B = x_nchw.shape[0]
    TB, Bp = _batch_tiling(B)
    grid = (Bp // TB,)

    # Flatten (row-major == nn.Flatten on contiguous NCHW). The zero-pad + bf16 cast
    # fuse into a single producer op under jit; padded columns are exact zeros.
    x = x_nchw.reshape(B, -1)
    xp = _pad2d(x, Bp, K1).astype(jnp.bfloat16)

    flops = 2 * Bp * (K1 * K2 + K2 * K3 + K3 * NO)
    bytes_accessed = (
        int(xp.size) * 2
        + sum(int(a.size) * a.dtype.itemsize for a in prepared_params)
        + Bp * NO * 2
    )
    cost = pl.CostEstimate(flops=flops, transcendentals=0,
                           bytes_accessed=bytes_accessed)

    out = pl.pallas_call(
        mlp_kernel,
        out_shape=jax.ShapeDtypeStruct((Bp, NO), jnp.bfloat16),
        grid=grid,
        in_specs=[
            pl.BlockSpec((TB, K1), lambda i: (i, 0)),   # batch-tiled, double-buffered
            pl.BlockSpec((K1, K2), lambda i: (0, 0)),   # parameters: VMEM-resident
            pl.BlockSpec((1, K2), lambda i: (0, 0)),
            pl.BlockSpec((K2, K3), lambda i: (0, 0)),
            pl.BlockSpec((1, K3), lambda i: (0, 0)),
            pl.BlockSpec((K3, NO), lambda i: (0, 0)),
            pl.BlockSpec((1, NO), lambda i: (0, 0)),
        ],
        out_specs=pl.BlockSpec((TB, NO), lambda i: (i, 0)),
        compiler_params=pltpu.CompilerParams(
            dimension_semantics=("parallel",)),
        cost_estimate=cost,
    )(xp, w1p, b1p, w2p, b2p, w3p, b3p)

    # Slice off batch/lane padding; stays fused inside the jitted graph.
    return out[:B, :out_features].astype(jnp.float32)


def init_params(key):
    """Deterministic init matching PyTorch Linear shapes.
    PyTorch weight is (out, in); we store the transpose (in, out)."""
    input_size = 2 * 14 * 14          # 392
    hidden = [392, 392]
    output_size = 2

    dims = [(input_size, hidden[0]), (hidden[0], hidden[1]), (hidden[1], output_size)]
    params = []
    for (fan_in, fan_out) in dims:
        key, kw, kb = jax.random.split(key, 3)
        bound = 1.0 / jnp.sqrt(fan_in)
        w = jax.random.uniform(kw, (fan_in, fan_out), jnp.float32, -bound, bound)
        b = jax.random.uniform(kb, (1, fan_out), jnp.float32, -bound, bound)
        params.extend([w, b])
    return tuple(params)


if __name__ == "__main__":
    key = jax.random.PRNGKey(0)
    key, kx = jax.random.split(key)

    # Small batch; input shape implied by the module: (B, 2, 14, 14).
    B = 8
    x = jax.random.normal(kx, (B, 2, 14, 14), jnp.float32)

    params = init_params(key)
    # One-time parameter prep (hoisted out of the per-call forward).
    prepared, out_features = prepare_params(params)

    logits = baseline_net_forward(x, prepared, out_features=out_features)
    logits = jax.block_until_ready(logits)
    assert logits.shape == (B, out_features)

    # Reference mirroring the kernel numerics: bf16 weights/activations, f32 MXU
    # accumulation, epilogue in the prepared bias dtype, bf16 logits writeback.
    w1, b1, w2, b2, w3, b3 = params
    ep = prepared[1].dtype
    xf = x.reshape(B, -1).astype(jnp.bfloat16)
    h = jnp.dot(xf, w1.astype(jnp.bfloat16), preferred_element_type=jnp.float32)
    h = jnp.maximum(h.astype(ep) + b1.astype(ep), 0).astype(jnp.bfloat16)
    h = jnp.dot(h, w2.astype(jnp.bfloat16), preferred_element_type=jnp.float32)
    h = jnp.maximum(h.astype(ep) + b2.astype(ep), 0).astype(jnp.bfloat16)
    ref = jnp.dot(h, w3.astype(jnp.bfloat16), preferred_element_type=jnp.float32) + b3
    ref = ref.astype(jnp.bfloat16).astype(jnp.float32)
    assert jnp.allclose(logits, ref, atol=2e-2, rtol=2e-2)

    # Sanity vs. full-f32 math (loose tolerance for bf16 rounding).
    f32 = x.reshape(B, -1)
    f32 = jnp.maximum(f32 @ w1 + b1, 0.0)
    f32 = jnp.maximum(f32 @ w2 + b2, 0.0)
    f32 = f32 @ w3 + b3
    assert jnp.allclose(logits, f32, atol=2e-1, rtol=2e-1)

    print("KERNEL_OK")
</pallas_src>

<mosaic_0001>
module attributes {stable_mosaic.version = 11 : i64} {
  func.func @mlp_kernel(%arg0: i32, %arg1: memref<16x512xbf16, #tpu.memory_space<vmem>>, %arg2: memref<512x512xbf16, #tpu.memory_space<vmem>>, %arg3: memref<1x512xf32, #tpu.memory_space<vmem>>, %arg4: memref<512x512xbf16, #tpu.memory_space<vmem>>, %arg5: memref<1x512xf32, #tpu.memory_space<vmem>>, %arg6: memref<512x128xbf16, #tpu.memory_space<vmem>>, %arg7: memref<1x128xf32, #tpu.memory_space<vmem>>, %arg8: memref<16x128xbf16, #tpu.memory_space<vmem>>) attributes {dimension_semantics = [#tpu.dimension_semantics<parallel>], iteration_bounds = array<i64: 1>, scalar_prefetch = 0 : i64, scratch_operands = 0 : i64, tpu.core_type = #tpu.core_type<tc>, window_params = [{transform_indices = @transform_0, window_bounds = array<i64: 16, 512>}, {pipeline_mode = #tpu.pipeline_mode<synchronous>, transform_indices = @transform_1, window_bounds = array<i64: 512, 512>}, {pipeline_mode = #tpu.pipeline_mode<synchronous>, transform_indices = @transform_2, window_bounds = array<i64: 1, 512>}, {pipeline_mode = #tpu.pipeline_mode<synchronous>, transform_indices = @transform_3, window_bounds = array<i64: 512, 512>}, {pipeline_mode = #tpu.pipeline_mode<synchronous>, transform_indices = @transform_4, window_bounds = array<i64: 1, 512>}, {pipeline_mode = #tpu.pipeline_mode<synchronous>, transform_indices = @transform_5, window_bounds = array<i64: 512, 128>}, {pipeline_mode = #tpu.pipeline_mode<synchronous>, transform_indices = @transform_6, window_bounds = array<i64: 1, 128>}, {transform_indices = @transform_7, window_bounds = array<i64: 16, 128>}]} {
    %c0 = arith.constant 0 : index
    %c0_0 = arith.constant 0 : index
    %0 = vector.load %arg1[%c0, %c0_0] : memref<16x512xbf16, #tpu.memory_space<vmem>>, vector<16x512xbf16>
    %c0_1 = arith.constant 0 : index
    %c0_2 = arith.constant 0 : index
    %1 = vector.load %arg2[%c0_1, %c0_2] : memref<512x512xbf16, #tpu.memory_space<vmem>>, vector<512x512xbf16>
    %cst = arith.constant dense<0.000000e+00> : vector<16x512xf32>
    %2 = tpu.matmul %0, %1, %cst {dimension_numbers = #tpu.dot_dimension_numbers<[1], [0], [0], [1], [0, 0, 1, 1], [], []>} : vector<16x512xbf16>, vector<512x512xbf16>, vector<16x512xf32> -> vector<16x512xf32>
    %c0_3 = arith.constant 0 : index
    %c0_4 = arith.constant 0 : index
    %3 = vector.load %arg3[%c0_3, %c0_4] : memref<1x512xf32, #tpu.memory_space<vmem>>, vector<1x512xf32>
    %4 = vector.broadcast %3 : vector<1x512xf32> to vector<16x512xf32>
    %5 = arith.addf %2, %4 : vector<16x512xf32>
    %cst_5 = arith.constant 0.000000e+00 : f32
    %6 = vector.broadcast %cst_5 : f32 to vector<16x512xf32>
    %7 = arith.maximumf %5, %6 : vector<16x512xf32>
    %8 = arith.truncf %7 : vector<16x512xf32> to vector<16x512xbf16>
    %c0_6 = arith.constant 0 : index
    %c0_7 = arith.constant 0 : index
    %9 = vector.load %arg4[%c0_6, %c0_7] : memref<512x512xbf16, #tpu.memory_space<vmem>>, vector<512x512xbf16>
    %cst_8 = arith.constant dense<0.000000e+00> : vector<16x512xf32>
    %10 = tpu.matmul %8, %9, %cst_8 {dimension_numbers = #tpu.dot_dimension_numbers<[1], [0], [0], [1], [0, 0, 1, 1], [], []>} : vector<16x512xbf16>, vector<512x512xbf16>, vector<16x512xf32> -> vector<16x512xf32>
    %c0_9 = arith.constant 0 : index
    %c0_10 = arith.constant 0 : index
    %11 = vector.load %arg5[%c0_9, %c0_10] : memref<1x512xf32, #tpu.memory_space<vmem>>, vector<1x512xf32>
    %12 = vector.broadcast %11 : vector<1x512xf32> to vector<16x512xf32>
    %13 = arith.addf %10, %12 : vector<16x512xf32>
    %cst_11 = arith.constant 0.000000e+00 : f32
    %14 = vector.broadcast %cst_11 : f32 to vector<16x512xf32>
    %15 = arith.maximumf %13, %14 : vector<16x512xf32>
    %16 = arith.truncf %15 : vector<16x512xf32> to vector<16x512xbf16>
    %c0_12 = arith.constant 0 : index
    %c0_13 = arith.constant 0 : index
    %17 = vector.load %arg6[%c0_12, %c0_13] : memref<512x128xbf16, #tpu.memory_space<vmem>>, vector<512x128xbf16>
    %cst_14 = arith.constant dense<0.000000e+00> : vector<16x128xf32>
    %18 = tpu.matmul %16, %17, %cst_14 {dimension_numbers = #tpu.dot_dimension_numbers<[1], [0], [0], [1], [0, 0, 1, 1], [], []>} : vector<16x512xbf16>, vector<512x128xbf16>, vector<16x128xf32> -> vector<16x128xf32>
    %c0_15 = arith.constant 0 : index
    %c0_16 = arith.constant 0 : index
    %19 = vector.load %arg7[%c0_15, %c0_16] : memref<1x128xf32, #tpu.memory_space<vmem>>, vector<1x128xf32>
    %20 = vector.broadcast %19 : vector<1x128xf32> to vector<16x128xf32>
    %21 = arith.addf %18, %20 : vector<16x128xf32>
    %22 = arith.truncf %21 : vector<16x128xf32> to vector<16x128xbf16>
    %c0_17 = arith.constant 0 : index
    %c0_18 = arith.constant 0 : index
    %23 = vector.load %arg8[%c0_17, %c0_18] : memref<16x128xbf16, #tpu.memory_space<vmem>>, vector<16x128xbf16>
    tpu.vector_store %arg8[%c0_17, %c0_18], %22 {strides = array<i32>} : memref<16x128xbf16, #tpu.memory_space<vmem>>, vector<16x128xbf16>,
    return
  }
  func.func @transform_0(%arg0: i32) -> (i32, i32) {
    %c0_i32 = arith.constant 0 : i32
    %c0_i32_0 = arith.constant 0 : i32
    return %arg0, %c0_i32 : i32, i32
  }
  func.func @transform_1(%arg0: i32) -> (i32, i32) {
    %c0_i32 = arith.constant 0 : i32
    %c0_i32_0 = arith.constant 0 : i32
    %c0_i32_1 = arith.constant 0 : i32
    return %c0_i32, %c0_i32_0 : i32, i32
  }
  func.func @transform_2(%arg0: i32) -> (i32, i32) {
    %c0_i32 = arith.constant 0 : i32
    %c0_i32_0 = arith.constant 0 : i32
    %c0_i32_1 = arith.constant 0 : i32
    return %c0_i32, %c0_i32_0 : i32, i32
  }
  func.func @transform_3(%arg0: i32) -> (i32, i32) {
    %c0_i32 = arith.constant 0 : i32
    %c0_i32_0 = arith.constant 0 : i32
    %c0_i32_1 = arith.constant 0 : i32
    return %c0_i32, %c0_i32_0 : i32, i32
  }
  func.func @transform_4(%arg0: i32) -> (i32, i32) {
    %c0_i32 = arith.constant 0 : i32
    %c0_i32_0 = arith.constant 0 : i32
    %c0_i32_1 = arith.constant 0 : i32
    return %c0_i32, %c0_i32_0 : i32, i32
  }
  func.func @transform_5(%arg0: i32) -> (i32, i32) {
    %c0_i32 = arith.constant 0 : i32
    %c0_i32_0 = arith.constant 0 : i32
    %c0_i32_1 = arith.constant 0 : i32
    return %c0_i32, %c0_i32_0 : i32, i32
  }
  func.func @transform_6(%arg0: i32) -> (i32, i32) {
    %c0_i32 = arith.constant 0 : i32
    %c0_i32_0 = arith.constant 0 : i32
    %c0_i32_1 = arith.constant 0 : i32
    return %c0_i32, %c0_i32_0 : i32, i32
  }
  func.func @transform_7(%arg0: i32) -> (i32, i32) {
    %c0_i32 = arith.constant 0 : i32
    %c0_i32_0 = arith.constant 0 : i32
    return %arg0, %c0_i32 : i32, i32
  }
}

</mosaic_0001>

<llo_original>
// kernel: baseline_net_forward.1
$region0: #{baseline_net_forward.1}
  #allocation0 [shape = 'u32[]', space=smem, size = 0x4, offset = 0x4, fixed_abs, tag = 'smem constant byte address 0x4 - core index']
  #allocation1 [shape = 'u32[144,128]{1,0:T(1,128)}', space=vmem, size = 0x12000, scoped, tag = 'internal scratch']
  %s0 = inlined_call_operand.vmem [shape: bf16[16,512], index: 0, kind: input, shape index: {}]
  %s1 = inlined_call_operand.hbm [shape: bf16[512,512], index: 1, kind: input, shape index: {}]
  %s2 = inlined_call_operand.vmem [shape: f32[1,512], index: 2, kind: input, shape index: {}]
  %s3 = inlined_call_operand.hbm [shape: bf16[512,512], index: 3, kind: input, shape index: {}]
  %s4 = inlined_call_operand.vmem [shape: f32[1,512], index: 4, kind: input, shape index: {}]
  %s5 = inlined_call_operand.vmem [shape: bf16[512,128], index: 5, kind: input, shape index: {}]
  %s6 = inlined_call_operand.vmem [shape: f32[1,128], index: 6, kind: input, shape index: {}]
  %s7 = inlined_call_operand.vmem [shape: bf16[16,128], index: 7, kind: output, shape index: {}]
  %s8 = sld [smem:[#allocation0]]
  $region46: #{baseline_net_forward.1} parent=0
    _
  %s10 = ssub.s32 1, %s8
  %s11 = scalar_select 0, %s10, %s8
  $region1: #{baseline_net_forward.1} parent=0
    #allocation2 [shape = 'u8[524288]{0}', space=vmem, size = 0x80000, scoped, tag = 'input window, operand 1, single buffered']
    #allocation3 [shape = 's32[1]{0}', space=sflag, size = 0x4, scoped, tag = 'scoped memory for baseline_net_forward.1']
    #allocation4 [shape = 'u8[524288]{0}', space=vmem, size = 0x80000, scoped, tag = 'input window, operand 3, single buffered']
    #allocation5 [shape = 's32[1]{0}', space=sflag, size = 0x4, scoped, tag = 'scoped memory for baseline_net_forward.1']
    %12 = vsyncpa [#allocation3], 0
    %13 = vsyncpa [#allocation5], 0
    // Predicated region
    $region2: #{baseline_net_forward.1} parent=1 // pred_check
      _
    $region3: #{baseline_net_forward.1} parent=1 // pred_check_branch
      %15 = sbr.rel (0) target = $region5
    $region4: #{baseline_net_forward.1} parent=1 // pred_region
      _
    $region5: #{baseline_net_forward.1} parent=1 // pred_fallthru
      _
    // Predicated region
    $region6: #{baseline_net_forward.1} parent=1 // pred_check
      _
    $region7: #{baseline_net_forward.1} parent=1 // pred_check_branch
      %17 = sbr.rel (0) target = $region9
    $region8: #{baseline_net_forward.1} parent=1 // pred_region
      %s19 = ssub.s32 16384, 16384
      %20 = vsyncadd [#allocation3], %s19
      %s21 = sshll.u32 [#allocation2], 4
      %s22 = int_to_ptr.vmem [resolvable:$true] %s21
      %27 = dma.hbm_to_vmem [thread:$0]  %s1, 16384, %s22, [#allocation3], 256, 256, 16
    $region9: #{baseline_net_forward.1} parent=1 // pred_fallthru
      _
    // Predicated region
    $region10: #{baseline_net_forward.1} parent=1 // pred_check
      _
    $region11: #{baseline_net_forward.1} parent=1 // pred_check_branch
      %29 = sbr.rel (0) target = $region13
    $region12: #{baseline_net_forward.1} parent=1 // pred_region
      _
    $region13: #{baseline_net_forward.1} parent=1 // pred_fallthru
      _
    // Predicated region
    $region14: #{baseline_net_forward.1} parent=1 // pred_check
      _
    $region15: #{baseline_net_forward.1} parent=1 // pred_check_branch
      %31 = sbr.rel (0) target = $region17
    $region16: #{baseline_net_forward.1} parent=1 // pred_region
      %s33 = ssub.s32 16384, 16384
      %34 = vsyncadd [#allocation5], %s33
      %s35 = sshll.u32 [#allocation4], 4
      %s36 = int_to_ptr.vmem [resolvable:$true] %s35
      %41 = dma.hbm_to_vmem [thread:$0]  %s3, 16384, %s36, [#allocation5], 256, 256, 16
    $region17: #{baseline_net_forward.1} parent=1 // pred_fallthru
      _
    // Predicated region
    $region18: #{baseline_net_forward.1} parent=1 // pred_check
      _
    $region19: #{baseline_net_forward.1} parent=1 // pred_check_branch
      %43 = sbr.rel (0) target = $region21
    $region20: #{baseline_net_forward.1} parent=1 // pred_region
      _
    $region21: #{baseline_net_forward.1} parent=1 // pred_fallthru
      _
    // Predicated region
    $region22: #{baseline_net_forward.1} parent=1 // pred_check
      _
    $region23: #{baseline_net_forward.1} parent=1 // pred_check_branch
      %45 = sbr.rel (0) target = $region25
    $region24: #{baseline_net_forward.1} parent=1 // pred_region
      _
    $region25: #{baseline_net_forward.1} parent=1 // pred_fallthru
      _
    // Predicated region
    $region26: #{baseline_net_forward.1} parent=1 // pred_check
      _
    $region27: #{baseline_net_forward.1} parent=1 // pred_check_branch
      %47 = sbr.rel (0) target = $region29
    $region28: #{baseline_net_forward.1} parent=1 // pred_region
      _
    $region29: #{baseline_net_forward.1} parent=1 // pred_fallthru
      _
    // Predicated region
    $region30: #{baseline_net_forward.1} parent=1 // pred_check
      _
    $region31: #{baseline_net_forward.1} parent=1 // pred_check_branch
      %49 = sbr.rel (0) target = $region33
    $region32: #{baseline_net_forward.1} parent=1 // pred_region
      %50 = dma.done [#allocation3], 16384
    $region33: #{baseline_net_forward.1} parent=1 // pred_fallthru
      _
    // Predicated region
    $region34: #{baseline_net_forward.1} parent=1 // pred_check
      _
    $region35: #{baseline_net_forward.1} parent=1 // pred_check_branch
      %52 = sbr.rel (0) target = $region37
    $region36: #{baseline_net_forward.1} parent=1 // pred_region
      %53 = dma.done [#allocation5], 16384
    $region37: #{baseline_net_forward.1} parent=1 // pred_fallthru
      _
    %v55 = vld [vmem:[%s0] sm:$0xff]
    %v56 = vld [vmem:[%s0 + $0x8] sm:$0xff]
    %v57 = vld [vmem:[%s0 + $0x10] sm:$0xff]
    %v58 = vld [vmem:[%s0 + $0x18] sm:$0xff]
    %v59 = vld [vmem:[#allocation2] sm:$0xff]
    %v60 = vld [vmem:[#allocation2 + $0x8] sm:$0xff]
    %v61 = vld [vmem:[#allocation2 + $0x10] sm:$0xff]
    %v62 = vld [vmem:[#allocation2 + $0x18] sm:$0xff]
    %v63 = vld [vmem:[#allocation2 + $0x20] sm:$0xff]
    %v64 = vld [vmem:[#allocation2 + $0x28] sm:$0xff]
    %v65 = vld [vmem:[#allocation2 + $0x30] sm:$0xff]
    %v66 = vld [vmem:[#allocation2 + $0x38] sm:$0xff]
    %v67 = vld [vmem:[#allocation2 + $0x40] sm:$0xff]
    %v68 = vld [vmem:[#allocation2 + $0x48] sm:$0xff]
    %v69 = vld [vmem:[#allocation2 + $0x50] sm:$0xff]
    %v70 = vld [vmem:[#allocation2 + $0x58] sm:$0xff]
    %v71 = vld [vmem:[#allocation2 + $0x60] sm:$0xff]
    %v72 = vld [vmem:[#allocation2 + $0x68] sm:$0xff]
    %v73 = vld [vmem:[#allocation2 + $0x70] sm:$0xff]
    %v74 = vld [vmem:[#allocation2 + $0x78] sm:$0xff]
    %v75 = vld [vmem:[#allocation2 + $0x80] sm:$0xff]
    %v76 = vld [vmem:[#allocation2 + $0x88] sm:$0xff]
    %v77 = vld [vmem:[#allocation2 + $0x90] sm:$0xff]
    %v78 = vld [vmem:[#allocation2 + $0x98] sm:$0xff]
    %v79 = vld [vmem:[#allocation2 + $0xa0] sm:$0xff]
    %v80 = vld [vmem:[#allocation2 + $0xa8] sm:$0xff]
    %v81 = vld [vmem:[#allocation2 + $0xb0] sm:$0xff]
    %v82 = vld [vmem:[#allocation2 + $0xb8] sm:$0xff]
    %v83 = vld [vmem:[#allocation2 + $0xc0] sm:$0xff]
    %v84 = vld [vmem:[#allocation2 + $0xc8] sm:$0xff]
    %v85 = vld [vmem:[#allocation2 + $0xd0] sm:$0xff]
    %v86 = vld [vmem:[#allocation2 + $0xd8] sm:$0xff]
    %v87 = vld [vmem:[#allocation2 + $0xe0] sm:$0xff]
    %v88 = vld [vmem:[#allocation2 + $0xe8] sm:$0xff]
    %v89 = vld [vmem:[#allocation2 + $0xf0] sm:$0xff]
    %v90 = vld [vmem:[#allocation2 + $0xf8] sm:$0xff]
    %v91 = vld [vmem:[#allocation2 + $0x100] sm:$0xff]
    %v92 = vld [vmem:[#allocation2 + $0x108] sm:$0xff]
    %v93 = vld [vmem:[#allocation2 + $0x110] sm:$0xff]
    %v94 = vld [vmem:[#allocation2 + $0x118] sm:$0xff]
    %v95 = vld [vmem:[#allocation2 + $0x120] sm:$0xff]
    %v96 = vld [vmem:[#allocation2 + $0x128] sm:$0xff]
    %v97 = vld [vmem:[#allocation2 + $0x130] sm:$0xff]
    %v98 = vld [vmem:[#allocation2 + $0x138] sm:$0xff]
    %v99 = vld [vmem:[#allocation2 + $0x140] sm:$0xff]
    %v100 = vld [vmem:[#allocation2 + $0x148] sm:$0xff]
    %v101 = vld [vmem:[#allocation2 + $0x150] sm:$0xff]
    %v102 = vld [vmem:[#allocation2 + $0x158] sm:$0xff]
    %v103 = vld [vmem:[#allocation2 + $0x160] sm:$0xff]
    %v104 = vld [vmem:[#allocation2 + $0x168] sm:$0xff]
    %v105 = vld [vmem:[#allocation2 + $0x170] sm:$0xff]
    %v106 = vld [vmem:[#allocation2 + $0x178] sm:$0xff]
    %v107 = vld [vmem:[#allocation2 + $0x180] sm:$0xff]
    %v108 = vld [vmem:[#allocation2 + $0x188] sm:$0xff]
    %v109 = vld [vmem:[#allocation2 + $0x190] sm:$0xff]
    %v110 = vld [vmem:[#allocation2 + $0x198] sm:$0xff]
    %v111 = vld [vmem:[#allocation2 + $0x1a0] sm:$0xff]
    %v112 = vld [vmem:[#allocation2 + $0x1a8] sm:$0xff]
    %v113 = vld [vmem:[#allocation2 + $0x1b0] sm:$0xff]
    %v114 = vld [vmem:[#allocation2 + $0x1b8] sm:$0xff]
    %v115 = vld [vmem:[#allocation2 + $0x1c0] sm:$0xff]
    %v116 = vld [vmem:[#allocation2 + $0x1c8] sm:$0xff]
    %v117 = vld [vmem:[#allocation2 + $0x1d0] sm:$0xff]
    %v118 = vld [vmem:[#allocation2 + $0x1d8] sm:$0xff]
    %v119 = vld [vmem:[#allocation2 + $0x1e0] sm:$0xff]
    %v120 = vld [vmem:[#allocation2 + $0x1e8] sm:$0xff]
    %v121 = vld [vmem:[#allocation2 + $0x1f0] sm:$0xff]
    %v122 = vld [vmem:[#allocation2 + $0x1f8] sm:$0xff]
    %v123 = vld [vmem:[#allocation2 + $0x200] sm:$0xff]
    %v124 = vld [vmem:[#allocation2 + $0x208] sm:$0xff]
    %v125 = vld [vmem:[#allocation2 + $0x210] sm:$0xff]
    %v126 = vld [vmem:[#allocation2 + $0x218] sm:$0xff]
    %v127 = vld [vmem:[#allocation2 + $0x220] sm:$0xff]
    %v128 = vld [vmem:[#allocation2 + $0x228] sm:$0xff]
    %v129 = vld [vmem:[#allocation2 + $0x230] sm:$0xff]
    %v130 = vld [vmem:[#allocation2 + $0x238] sm:$0xff]
    %v131 = vld [vmem:[#allocation2 + $0x240] sm:$0xff]
    %v132 = vld [vmem:[#allocation2 + $0x248] sm:$0xff]
    %v133 = vld [vmem:[#allocation2 + $0x250] sm:$0xff]
    %v134 = vld [vmem:[#allocation2 + $0x258] sm:$0xff]
    %v135 = vld [vmem:[#allocation2 + $0x260] sm:$0xff]
    %v136 = vld [vmem:[#allocation2 + $0x268] sm:$0xff]
    %v137 = vld [vmem:[#allocation2 + $0x270] sm:$0xff]
    %v138 = vld [vmem:[#allocation2 + $0x278] sm:$0xff]
    %v139 = vld [vmem:[#allocation2 + $0x280] sm:$0xff]
    %v140 = vld [vmem:[#allocation2 + $0x288] sm:$0xff]
    %v141 = vld [vmem:[#allocation2 + $0x290] sm:$0xff]
    %v142 = vld [vmem:[#allocation2 + $0x298] sm:$0xff]
    %v143 = vld [vmem:[#allocation2 + $0x2a0] sm:$0xff]
    %v144 = vld [vmem:[#allocation2 + $0x2a8] sm:$0xff]
    %v145 = vld [vmem:[#allocation2 + $0x2b0] sm:$0xff]
    %v146 = vld [vmem:[#allocation2 + $0x2b8] sm:$0xff]
    %v147 = vld [vmem:[#allocation2 + $0x2c0] sm:$0xff]
    %v148 = vld [vmem:[#allocation2 + $0x2c8] sm:$0xff]
    %v149 = vld [vmem:[#allocation2 + $0x2d0] sm:$0xff]
    %v150 = vld [vmem:[#allocation2 + $0x2d8] sm:$0xff]
    %v151 = vld [vmem:[#allocation2 + $0x2e0] sm:$0xff]
    %v152 = vld [vmem:[#allocation2 + $0x2e8] sm:$0xff]
    %v153 = vld [vmem:[#allocation2 + $0x2f0] sm:$0xff]
    %v154 = vld [vmem:[#allocation2 + $0x2f8] sm:$0xff]
    %v155 = vld [vmem:[#allocation2 + $0x300] sm:$0xff]
    %v156 = vld [vmem:[#allocation2 + $0x308] sm:$0xff]
    %v157 = vld [vmem:[#allocation2 + $0x310] sm:$0xff]
    %v158 = vld [vmem:[#allocation2 + $0x318] sm:$0xff]
    %v159 = vld [vmem:[#allocation2 + $0x320] sm:$0xff]
    %v160 = vld [vmem:[#allocation2 + $0x328] sm:$0xff]
    %v161 = vld [vmem:[#allocation2 + $0x330] sm:$0xff]
    %v162 = vld [vmem:[#allocation2 + $0x338] sm:$0xff]
    %v163 = vld [vmem:[#allocation2 + $0x340] sm:$0xff]
    %v164 = vld [vmem:[#allocation2 + $0x348] sm:$0xff]
    %v165 = vld [vmem:[#allocation2 + $0x350] sm:$0xff]
    %v166 = vld [vmem:[#allocation2 + $0x358] sm:$0xff]
    %v167 = vld [vmem:[#allocation2 + $0x360] sm:$0xff]
    %v168 = vld [vmem:[#allocation2 + $0x368] sm:$0xff]
    %v169 = vld [vmem:[#allocation2 + $0x370] sm:$0xff]
    %v170 = vld [vmem:[#allocation2 + $0x378] sm:$0xff]
    %v171 = vld [vmem:[#allocation2 + $0x380] sm:$0xff]
    %v172 = vld [vmem:[#allocation2 + $0x388] sm:$0xff]
    %v173 = vld [vmem:[#allocation2 + $0x390] sm:$0xff]
    %v174 = vld [vmem:[#allocation2 + $0x398] sm:$0xff]
    %v175 = vld [vmem:[#allocation2 + $0x3a0] sm:$0xff]
    %v176 = vld [vmem:[#allocation2 + $0x3a8] sm:$0xff]
    %v177 = vld [vmem:[#allocation2 + $0x3b0] sm:$0xff]
    %v178 = vld [vmem:[#allocation2 + $0x3b8] sm:$0xff]
    %v179 = vld [vmem:[#allocation2 + $0x3c0] sm:$0xff]
    %v180 = vld [vmem:[#allocation2 + $0x3c8] sm:$0xff]
    %v181 = vld [vmem:[#allocation2 + $0x3d0] sm:$0xff]
    %v182 = vld [vmem:[#allocation2 + $0x3d8] sm:$0xff]
    %v183 = vld [vmem:[#allocation2 + $0x3e0] sm:$0xff]
    %v184 = vld [vmem:[#allocation2 + $0x3e8] sm:$0xff]
    %v185 = vld [vmem:[#allocation2 + $0x3f0] sm:$0xff]
    %v186 = vld [vmem:[#allocation2 + $0x3f8] sm:$0xff]
    %v187 = vld [vmem:[%s2] sm:$0xf]
    %v189 = vlaneseq
    %v190 = vshrl.u32 %v189, 7
    %v191 = vsub.s32 0, %v190
    %v192 = vrot.slane %v187, %v191
    %v193 = vlaneseq
    %v194 = vshrl.u32 %v193, 7
    %v195 = vsub.s32 1, %v194
    %v196 = vrot.slane %v187, %v195
    %v197 = vlaneseq
    %v198 = vshrl.u32 %v197, 7
    %v199 = vsub.s32 2, %v198
    %v200 = vrot.slane %v187, %v199
    %v201 = vlaneseq
    %v202 = vshrl.u32 %v201, 7
    %v203 = vsub.s32 3, %v202
    %v204 = vrot.slane %v187, %v203
    %v213 = vunpack.c.l.b16 %v55
    %v214 = vunpack.c.h.b16 %v55
    %v215 = vunpack.c.l.b16 %v56
    %v216 = vunpack.c.h.b16 %v56
    %v217 = vunpack.c.l.b16 %v57
    %v218 = vunpack.c.h.b16 %v57
    %v219 = vunpack.c.l.b16 %v58
    %v220 = vunpack.c.h.b16 %v58
    %v221 = vpack.c.b16 %v217, %v213
    %v222 = vpack.c.b16 %v218, %v214
    %v223 = vpack.c.b16 %v219, %v215
    %v224 = vpack.c.b16 %v220, %v216
    %v357 = vunpack.c.l.b16 %v59
    %v358 = vunpack.c.h.b16 %v59
    %v359 = vunpack.c.l.b16 %v60
    %v360 = vunpack.c.h.b16 %v60
    %v361 = vunpack.c.l.b16 %v61
    %v362 = vunpack.c.h.b16 %v61
    %v363 = vunpack.c.l.b16 %v62
    %v364 = vunpack.c.h.b16 %v62
    %v365 = vunpack.c.l.b16 %v63
    %v366 = vunpack.c.h.b16 %v63
    %v367 = vunpack.c.l.b16 %v64
    %v368 = vunpack.c.h.b16 %v64
    %v369 = vunpack.c.l.b16 %v65
    %v370 = vunpack.c.h.b16 %v65
    %v371 = vunpack.c.l.b16 %v66
    %v372 = vunpack.c.h.b16 %v66
    %v373 = vunpack.c.l.b16 %v67
    %v374 = vunpack.c.h.b16 %v67
    %v375 = vunpack.c.l.b16 %v68
    %v376 = vunpack.c.h.b16 %v68
    %v377 = vunpack.c.l.b16 %v69
    %v378 = vunpack.c.h.b16 %v69
    %v379 = vunpack.c.l.b16 %v70
    %v380 = vunpack.c.h.b16 %v70
    %v381 = vunpack.c.l.b16 %v71
    %v382 = vunpack.c.h.b16 %v71
    %v383 = vunpack.c.l.b16 %v72
    %v384 = vunpack.c.h.b16 %v72
    %v385 = vunpack.c.l.b16 %v73
    %v386 = vunpack.c.h.b16 %v73
    %v387 = vunpack.c.l.b16 %v74
    %v388 = vunpack.c.h.b16 %v74
    %v389 = vunpack.c.l.b16 %v75
    %v390 = vunpack.c.h.b16 %v75
    %v391 = vunpack.c.l.b16 %v76
    %v392 = vunpack.c.h.b16 %v76
    %v393 = vunpack.c.l.b16 %v77
    %v394 = vunpack.c.h.b16 %v77
    %v395 = vunpack.c.l.b16 %v78
    %v396 = vunpack.c.h.b16 %v78
    %v397 = vunpack.c.l.b16 %v79
    %v398 = vunpack.c.h.b16 %v79
    %v399 = vunpack.c.l.b16 %v80
    %v400 = vunpack.c.h.b16 %v80
    %v401 = vunpack.c.l.b16 %v81
    %v402 = vunpack.c.h.b16 %v81
    %v403 = vunpack.c.l.b16 %v82
    %v404 = vunpack.c.h.b16 %v82
    %v405 = vunpack.c.l.b16 %v83
    %v406 = vunpack.c.h.b16 %v83
    %v407 = vunpack.c.l.b16 %v84
    %v408 = vunpack.c.h.b16 %v84
    %v409 = vunpack.c.l.b16 %v85
    %v410 = vunpack.c.h.b16 %v85
    %v411 = vunpack.c.l.b16 %v86
    %v412 = vunpack.c.h.b16 %v86
    %v413 = vunpack.c.l.b16 %v87
    %v414 = vunpack.c.h.b16 %v87
    %v415 = vunpack.c.l.b16 %v88
    %v416 = vunpack.c.h.b16 %v88
    %v417 = vunpack.c.l.b16 %v89
    %v418 = vunpack.c.h.b16 %v89
    %v419 = vunpack.c.l.b16 %v90
    %v420 = vunpack.c.h.b16 %v90
    %v421 = vunpack.c.l.b16 %v91
    %v422 = vunpack.c.h.b16 %v91
    %v423 = vunpack.c.l.b16 %v92
    %v424 = vunpack.c.h.b16 %v92
    %v425 = vunpack.c.l.b16 %v93
    %v426 = vunpack.c.h.b16 %v93
    %v427 = vunpack.c.l.b16 %v94
    %v428 = vunpack.c.h.b16 %v94
    %v429 = vunpack.c.l.b16 %v95
    %v430 = vunpack.c.h.b16 %v95
    %v431 = vunpack.c.l.b16 %v96
    %v432 = vunpack.c.h.b16 %v96
    %v433 = vunpack.c.l.b16 %v97
    %v434 = vunpack.c.h.b16 %v97
    %v435 = vunpack.c.l.b16 %v98
    %v436 = vunpack.c.h.b16 %v98
    %v437 = vunpack.c.l.b16 %v99
    %v438 = vunpack.c.h.b16 %v99
    %v439 = vunpack.c.l.b16 %v100
    %v440 = vunpack.c.h.b16 %v100
    %v441 = vunpack.c.l.b16 %v101
    %v442 = vunpack.c.h.b16 %v101
    %v443 = vunpack.c.l.b16 %v102
    %v444 = vunpack.c.h.b16 %v102
    %v445 = vunpack.c.l.b16 %v103
    %v446 = vunpack.c.h.b16 %v103
    %v447 = vunpack.c.l.b16 %v104
    %v448 = vunpack.c.h.b16 %v104
    %v449 = vunpack.c.l.b16 %v105
    %v450 = vunpack.c.h.b16 %v105
    %v451 = vunpack.c.l.b16 %v106
    %v452 = vunpack.c.h.b16 %v106
    %v453 = vunpack.c.l.b16 %v107
    %v454 = vunpack.c.h.b16 %v107
    %v455 = vunpack.c.l.b16 %v108
    %v456 = vunpack.c.h.b16 %v108
    %v457 = vunpack.c.l.b16 %v109
    %v458 = vunpack.c.h.b16 %v109
    %v459 = vunpack.c.l.b16 %v110
    %v460 = vunpack.c.h.b16 %v110
    %v461 = vunpack.c.l.b16 %v111
    %v462 = vunpack.c.h.b16 %v111
    %v463 = vunpack.c.l.b16 %v112
    %v464 = vunpack.c.h.b16 %v112
    %v465 = vunpack.c.l.b16 %v113
    %v466 = vunpack.c.h.b16 %v113
    %v467 = vunpack.c.l.b16 %v114
    %v468 = vunpack.c.h.b16 %v114
    %v469 = vunpack.c.l.b16 %v115
    %v470 = vunpack.c.h.b16 %v115
    %v471 = vunpack.c.l.b16 %v116
    %v472 = vunpack.c.h.b16 %v116
    %v473 = vunpack.c.l.b16 %v117
    %v474 = vunpack.c.h.b16 %v117
    %v475 = vunpack.c.l.b16 %v118
    %v476 = vunpack.c.h.b16 %v118
    %v477 = vunpack.c.l.b16 %v119
    %v478 = vunpack.c.h.b16 %v119
    %v479 = vunpack.c.l.b16 %v120
    %v480 = vunpack.c.h.b16 %v120
    %v481 = vunpack.c.l.b16 %v121
    %v482 = vunpack.c.h.b16 %v121
    %v483 = vunpack.c.l.b16 %v122
    %v484 = vunpack.c.h.b16 %v122
    %v485 = vunpack.c.l.b16 %v123
    %v486 = vunpack.c.h.b16 %v123
    %v487 = vunpack.c.l.b16 %v124
    %v488 = vunpack.c.h.b16 %v124
    %v489 = vunpack.c.l.b16 %v125
    %v490 = vunpack.c.h.b16 %v125
    %v491 = vunpack.c.l.b16 %v126
    %v492 = vunpack.c.h.b16 %v126
    %v493 = vunpack.c.l.b16 %v127
    %v494 = vunpack.c.h.b16 %v127
    %v495 = vunpack.c.l.b16 %v128
    %v496 = vunpack.c.h.b16 %v128
    %v497 = vunpack.c.l.b16 %v129
    %v498 = vunpack.c.h.b16 %v129
    %v499 = vunpack.c.l.b16 %v130
    %v500 = vunpack.c.h.b16 %v130
    %v501 = vunpack.c.l.b16 %v131
    %v502 = vunpack.c.h.b16 %v131
    %v503 = vunpack.c.l.b16 %v132
    %v504 = vunpack.c.h.b16 %v132
    %v505 = vunpack.c.l.b16 %v133
    %v506 = vunpack.c.h.b16 %v133
    %v507 = vunpack.c.l.b16 %v134
    %v508 = vunpack.c.h.b16 %v134
    %v509 = vunpack.c.l.b16 %v135
    %v510 = vunpack.c.h.b16 %v135
    %v511 = vunpack.c.l.b16 %v136
    %v512 = vunpack.c.h.b16 %v136
    %v513 = vunpack.c.l.b16 %v137
    %v514 = vunpack.c.h.b16 %v137
    %v515 = vunpack.c.l.b16 %v138
    %v516 = vunpack.c.h.b16 %v138
    %v517 = vunpack.c.l.b16 %v139
    %v518 = vunpack.c.h.b16 %v139
    %v519 = vunpack.c.l.b16 %v140
    %v520 = vunpack.c.h.b16 %v140
    %v521 = vunpack.c.l.b16 %v141
    %v522 = vunpack.c.h.b16 %v141
    %v523 = vunpack.c.l.b16 %v142
    %v524 = vunpack.c.h.b16 %v142
    %v525 = vunpack.c.l.b16 %v143
    %v526 = vunpack.c.h.b16 %v143
    %v527 = vunpack.c.l.b16 %v144
    %v528 = vunpack.c.h.b16 %v144
    %v529 = vunpack.c.l.b16 %v145
    %v530 = vunpack.c.h.b16 %v145
    %v531 = vunpack.c.l.b16 %v146
    %v532 = vunpack.c.h.b16 %v146
    %v533 = vunpack.c.l.b16 %v147
    %v534 = vunpack.c.h.b16 %v147
    %v535 = vunpack.c.l.b16 %v148
    %v536 = vunpack.c.h.b16 %v148
    %v537 = vunpack.c.l.b16 %v149
    %v538 = vunpack.c.h.b16 %v149
    %v539 = vunpack.c.l.b16 %v150
    %v540 = vunpack.c.h.b16 %v150
    %v541 = vunpack.c.l.b16 %v151
    %v542 = vunpack.c.h.b16 %v151
    %v543 = vunpack.c.l.b16 %v152
    %v544 = vunpack.c.h.b16 %v152
    %v545 = vunpack.c.l.b16 %v153
    %v546 = vunpack.c.h.b16 %v153
    %v547 = vunpack.c.l.b16 %v154
    %v548 = vunpack.c.h.b16 %v154
    %v549 = vunpack.c.l.b16 %v155
    %v550 = vunpack.c.h.b16 %v155
    %v551 = vunpack.c.l.b16 %v156
    %v552 = vunpack.c.h.b16 %v156
    %v553 = vunpack.c.l.b16 %v157
    %v554 = vunpack.c.h.b16 %v157
    %v555 = vunpack.c.l.b16 %v158
    %v556 = vunpack.c.h.b16 %v158
    %v557 = vunpack.c.l.b16 %v159
    %v558 = vunpack.c.h.b16 %v159
    %v559 = vunpack.c.l.b16 %v160
    %v560 = vunpack.c.h.b16 %v160
    %v561 = vunpack.c.l.b16 %v161
    %v562 = vunpack.c.h.b16 %v161
    %v563 = vunpack.c.l.b16 %v162
    %v564 = vunpack.c.h.b16 %v162
    %v565 = vunpack.c.l.b16 %v163
    %v566 = vunpack.c.h.b16 %v163
    %v567 = vunpack.c.l.b16 %v164
    %v568 = vunpack.c.h.b16 %v164
    %v569 = vunpack.c.l.b16 %v165
    %v570 = vunpack.c.h.b16 %v165
    %v571 = vunpack.c.l.b16 %v166
    %v572 = vunpack.c.h.b16 %v166
    %v573 = vunpack.c.l.b16 %v167
    %v574 = vunpack.c.h.b16 %v167
    %v575 = vunpack.c.l.b16 %v168
    %v576 = vunpack.c.h.b16 %v168
    %v577 = vunpack.c.l.b16 %v169
    %v578 = vunpack.c.h.b16 %v169
    %v579 = vunpack.c.l.b16 %v170
    %v580 = vunpack.c.h.b16 %v170
    %v581 = vunpack.c.l.b16 %v171
    %v582 = vunpack.c.h.b16 %v171
    %v583 = vunpack.c.l.b16 %v172
    %v584 = vunpack.c.h.b16 %v172
    %v585 = vunpack.c.l.b16 %v173
    %v586 = vunpack.c.h.b16 %v173
    %v587 = vunpack.c.l.b16 %v174
    %v588 = vunpack.c.h.b16 %v174
    %v589 = vunpack.c.l.b16 %v175
    %v590 = vunpack.c.h.b16 %v175
    %v591 = vunpack.c.l.b16 %v176
    %v592 = vunpack.c.h.b16 %v176
    %v593 = vunpack.c.l.b16 %v177
    %v594 = vunpack.c.h.b16 %v177
    %v595 = vunpack.c.l.b16 %v178
    %v596 = vunpack.c.h.b16 %v178
    %v597 = vunpack.c.l.b16 %v179
    %v598 = vunpack.c.h.b16 %v179
    %v599 = vunpack.c.l.b16 %v180
    %v600 = vunpack.c.h.b16 %v180
    %v601 = vunpack.c.l.b16 %v181
    %v602 = vunpack.c.h.b16 %v181
    %v603 = vunpack.c.l.b16 %v182
    %v604 = vunpack.c.h.b16 %v182
    %v605 = vunpack.c.l.b16 %v183
    %v606 = vunpack.c.h.b16 %v183
    %v607 = vunpack.c.l.b16 %v184
    %v608 = vunpack.c.h.b16 %v184
    %v609 = vunpack.c.l.b16 %v185
    %v610 = vunpack.c.h.b16 %v185
    %v611 = vunpack.c.l.b16 %v186
    %v612 = vunpack.c.h.b16 %v186
    %v613 = vpack.c.b16 %v361, %v357
    %v614 = vpack.c.b16 %v362, %v358
    %v615 = vpack.c.b16 %v363, %v359
    %v616 = vpack.c.b16 %v364, %v360
    %v617 = vpack.c.b16 %v369, %v365
    %v618 = vpack.c.b16 %v370, %v366
    %v619 = vpack.c.b16 %v371, %v367
    %v620 = vpack.c.b16 %v372, %v368
    %v621 = vpack.c.b16 %v377, %v373
    %v622 = vpack.c.b16 %v378, %v374
    %v623 = vpack.c.b16 %v379, %v375
    %v624 = vpack.c.b16 %v380, %v376
    %v625 = vpack.c.b16 %v385, %v381
    %v626 = vpack.c.b16 %v386, %v382
    %v627 = vpack.c.b16 %v387, %v383
    %v628 = vpack.c.b16 %v388, %v384
    %v629 = vpack.c.b16 %v393, %v389
    %v630 = vpack.c.b16 %v394, %v390
    %v631 = vpack.c.b16 %v395, %v391
    %v632 = vpack.c.b16 %v396, %v392
    %v633 = vpack.c.b16 %v401, %v397
    %v634 = vpack.c.b16 %v402, %v398
    %v635 = vpack.c.b16 %v403, %v399
    %v636 = vpack.c.b16 %v404, %v400
    %v637 = vpack.c.b16 %v409, %v405
    %v638 = vpack.c.b16 %v410, %v406
    %v639 = vpack.c.b16 %v411, %v407
    %v640 = vpack.c.b16 %v412, %v408
    %v641 = vpack.c.b16 %v417, %v413
    %v642 = vpack.c.b16 %v418, %v414
    %v643 = vpack.c.b16 %v419, %v415
    %v644 = vpack.c.b16 %v420, %v416
    %v645 = vpack.c.b16 %v425, %v421
    %v646 = vpack.c.b16 %v426, %v422
    %v647 = vpack.c.b16 %v427, %v423
    %v648 = vpack.c.b16 %v428, %v424
    %v649 = vpack.c.b16 %v433, %v429
    %v650 = vpack.c.b16 %v434, %v430
    %v651 = vpack.c.b16 %v435, %v431
    %v652 = vpack.c.b16 %v436, %v432
    %v653 = vpack.c.b16 %v441, %v437
    %v654 = vpack.c.b16 %v442, %v438
    %v655 = vpack.c.b16 %v443, %v439
    %v656 = vpack.c.b16 %v444, %v440
    %v657 = vpack.c.b16 %v449, %v445
    %v658 = vpack.c.b16 %v450, %v446
    %v659 = vpack.c.b16 %v451, %v447
    %v660 = vpack.c.b16 %v452, %v448
    %v661 = vpack.c.b16 %v457, %v453
    %v662 = vpack.c.b16 %v458, %v454
    %v663 = vpack.c.b16 %v459, %v455
    %v664 = vpack.c.b16 %v460, %v456
    %v665 = vpack.c.b16 %v465, %v461
    %v666 = vpack.c.b16 %v466, %v462
    %v667 = vpack.c.b16 %v467, %v463
    %v668 = vpack.c.b16 %v468, %v464
    %v669 = vpack.c.b16 %v473, %v469
    %v670 = vpack.c.b16 %v474, %v470
    %v671 = vpack.c.b16 %v475, %v471
    %v672 = vpack.c.b16 %v476, %v472
    %v673 = vpack.c.b16 %v481, %v477
    %v674 = vpack.c.b16 %v482, %v478
    %v675 = vpack.c.b16 %v483, %v479
    %v676 = vpack.c.b16 %v484, %v480
    %v677 = vpack.c.b16 %v489, %v485
    %v678 = vpack.c.b16 %v490, %v486
    %v679 = vpack.c.b16 %v491, %v487
    %v680 = vpack.c.b16 %v492, %v488
    %v681 = vpack.c.b16 %v497, %v493
    %v682 = vpack.c.b16 %v498, %v494
    %v683 = vpack.c.b16 %v499, %v495
    %v684 = vpack.c.b16 %v500, %v496
    %v685 = vpack.c.b16 %v505, %v501
    %v686 = vpack.c.b16 %v506, %v502
    %v687 = vpack.c.b16 %v507, %v503
    %v688 = vpack.c.b16 %v508, %v504
    %v689 = vpack.c.b16 %v513, %v509
    %v690 = vpack.c.b16 %v514, %v510
    %v691 = vpack.c.b16 %v515, %v511
    %v692 = vpack.c.b16 %v516, %v512
    %v693 = vpack.c.b16 %v521, %v517
    %v694 = vpack.c.b16 %v522, %v518
    %v695 = vpack.c.b16 %v523, %v519
    %v696 = vpack.c.b16 %v524, %v520
    %v697 = vpack.c.b16 %v529, %v525
    %v698 = vpack.c.b16 %v530, %v526
    %v699 = vpack.c.b16 %v531, %v527
    %v700 = vpack.c.b16 %v532, %v528
    %v701 = vpack.c.b16 %v537, %v533
    %v702 = vpack.c.b16 %v538, %v534
    %v703 = vpack.c.b16 %v539, %v535
    %v704 = vpack.c.b16 %v540, %v536
    %v705 = vpack.c.b16 %v545, %v541
    %v706 = vpack.c.b16 %v546, %v542
    %v707 = vpack.c.b16 %v547, %v543
    %v708 = vpack.c.b16 %v548, %v544
    %v709 = vpack.c.b16 %v553, %v549
    %v710 = vpack.c.b16 %v554, %v550
    %v711 = vpack.c.b16 %v555, %v551
    %v712 = vpack.c.b16 %v556, %v552
    %v713 = vpack.c.b16 %v561, %v557
    %v714 = vpack.c.b16 %v562, %v558
    %v715 = vpack.c.b16 %v563, %v559
    %v716 = vpack.c.b16 %v564, %v560
    %v717 = vpack.c.b16 %v569, %v565
    %v718 = vpack.c.b16 %v570, %v566
    %v719 = vpack.c.b16 %v571, %v567
    %v720 = vpack.c.b16 %v572, %v568
    %v721 = vpack.c.b16 %v577, %v573
    %v722 = vpack.c.b16 %v578, %v574
    %v723 = vpack.c.b16 %v579, %v575
    %v724 = vpack.c.b16 %v580, %v576
    %v725 = vpack.c.b16 %v585, %v581
    %v726 = vpack.c.b16 %v586, %v582
    %v727 = vpack.c.b16 %v587, %v583
    %v728 = vpack.c.b16 %v588, %v584
    %v729 = vpack.c.b16 %v593, %v589
    %v730 = vpack.c.b16 %v594, %v590
    %v731 = vpack.c.b16 %v595, %v591
    %v732 = vpack.c.b16 %v596, %v592
    %v733 = vpack.c.b16 %v601, %v597
    %v734 = vpack.c.b16 %v602, %v598
    %v735 = vpack.c.b16 %v603, %v599
    %v736 = vpack.c.b16 %v604, %v600
    %v737 = vpack.c.b16 %v609, %v605
    %v738 = vpack.c.b16 %v610, %v606
    %v739 = vpack.c.b16 %v611, %v607
    %v740 = vpack.c.b16 %v612, %v608
    %869 = vmatprep.subr.bf16.mxu0 %v614
    %870 = vmatpush1.bf16.msra.mxu0 %v613
    %871 = vmatprep.subr.bf16.mxu0 %v618
    %872 = vmatpush1.bf16.msra.mxu0 %v617
    %873 = vmatprep.subr.bf16.mxu0 %v622
    %874 = vmatpush1.bf16.msra.mxu0 %v621
    %875 = vmatprep.subr.bf16.mxu0 %v626
    %876 = vmatpush1.bf16.msra.mxu0 %v625
    %877 = vmatprep.subr.bf16.mxu0 %v630
    %878 = vmatpush1.bf16.msra.mxu0 %v629
    %879 = vmatprep.subr.bf16.mxu0 %v634
    %880 = vmatpush1.bf16.msra.mxu0 %v633
    %881 = vmatprep.subr.bf16.mxu0 %v638
    %882 = vmatpush1.bf16.msra.mxu0 %v637
    %883 = vmatprep.subr.bf16.mxu0 %v642
    %884 = vmatpush1.bf16.msra.mxu0 %v641
    %885 = vmatprep.subr.bf16.mxu0 %v646
    %886 = vmatpush1.bf16.msra.mxu0 %v645
    %887 = vmatprep.subr.bf16.mxu0 %v650
    %888 = vmatpush1.bf16.msra.mxu0 %v649
    %889 = vmatprep.subr.bf16.mxu0 %v654
    %890 = vmatpush1.bf16.msra.mxu0 %v653
    %891 = vmatprep.subr.bf16.mxu0 %v658
    %892 = vmatpush1.bf16.msra.mxu0 %v657
    %893 = vmatprep.subr.bf16.mxu0 %v662
    %894 = vmatpush1.bf16.msra.mxu0 %v661
    %895 = vmatprep.subr.bf16.mxu0 %v666
    %896 = vmatpush1.bf16.msra.mxu0 %v665
    %897 = vmatprep.subr.bf16.mxu0 %v670
    %898 = vmatpush1.bf16.msra.mxu0 %v669
    %899 = vmatprep.subr.bf16.mxu0 %v674
    %900 = vmatpush1.bf16.msra.mxu0 %v673
    %901 = vmatprep.mubr.bf16.mxu0 %v222
    %902 = vmatmul.mubr.bf16.gmra.mrb[0].mxu0 %v221
    %v903 = vpop.f32.mrb[0].mxu0
    %v904 = vadd.f32 %v192, %v903
    %v905 = vpop.f32.mrb[0].mxu0
    %v906 = vadd.f32 %v196, %v905
    %v907 = vpop.f32.mrb[0].mxu0
    %v908 = vadd.f32 %v192, %v907
    %v909 = vpop.f32.mrb[0].mxu0
    %v910 = vadd.f32 %v196, %v909
    %911 = vdwg.mxu0
    %912 = vmatprep.subr.bf16.mxu0 %v678
    %913 = vmatpush1.bf16.msra.mxu0 %v677
    %914 = vmatprep.subr.bf16.mxu0 %v682
    %915 = vmatpush1.bf16.msra.mxu0 %v681
    %916 = vmatprep.subr.bf16.mxu0 %v686
    %917 = vmatpush1.bf16.msra.mxu0 %v685
    %918 = vmatprep.subr.bf16.mxu0 %v690
    %919 = vmatpush1.bf16.msra.mxu0 %v689
    %920 = vmatprep.subr.bf16.mxu0 %v694
    %921 = vmatpush1.bf16.msra.mxu0 %v693
    %922 = vmatprep.subr.bf16.mxu0 %v698
    %923 = vmatpush1.bf16.msra.mxu0 %v697
    %924 = vmatprep.subr.bf16.mxu0 %v702
    %925 = vmatpush1.bf16.msra.mxu0 %v701
    %926 = vmatprep.subr.bf16.mxu0 %v706
    %927 = vmatpush1.bf16.msra.mxu0 %v705
    %928 = vmatprep.subr.bf16.mxu0 %v710
    %929 = vmatpush1.bf16.msra.mxu0 %v709
    %930 = vmatprep.subr.bf16.mxu0 %v714
    %931 = vmatpush1.bf16.msra.mxu0 %v713
    %932 = vmatprep.subr.bf16.mxu0 %v718
    %933 = vmatpush1.bf16.msra.mxu0 %v717
    %934 = vmatprep.subr.bf16.mxu0 %v722
    %935 = vmatpush1.bf16.msra.mxu0 %v721
    %936 = vmatprep.subr.bf16.mxu0 %v726
    %937 = vmatpush1.bf16.msra.mxu0 %v725
    %938 = vmatprep.subr.bf16.mxu0 %v730
    %939 = vmatpush1.bf16.msra.mxu0 %v729
    %940 = vmatprep.subr.bf16.mxu0 %v734
    %941 = vmatpush1.bf16.msra.mxu0 %v733
    %942 = vmatprep.subr.bf16.mxu0 %v738
    %943 = vmatpush1.bf16.msra.mxu0 %v737
    %944 = vmatprep.mubr.bf16.mxu0 %v224
    %945 = vmatmul.mubr.bf16.gmra.mrb[0].mxu0 %v223
    %v946 = vpop.f32.mrb[0].mxu0
    %v947 = vadd.f32 %v904, %v946
    %v948 = vpop.f32.mrb[0].mxu0
    %v949 = vadd.f32 %v906, %v948
    %v950 = vpop.f32.mrb[0].mxu0
    %v951 = vadd.f32 %v908, %v950
    %v952 = vpop.f32.mrb[0].mxu0
    %v953 = vadd.f32 %v910, %v952
    %954 = vdwg.mxu0
    %955 = vmatprep.subr.bf16.mxu0 %v616
    %956 = vmatpush1.bf16.msra.mxu0 %v615
    %957 = vmatprep.subr.bf16.mxu0 %v620
    %958 = vmatpush1.bf16.msra.mxu0 %v619
    %959 = vmatprep.subr.bf16.mxu0 %v624
    %960 = vmatpush1.bf16.msra.mxu0 %v623
    %961 = vmatprep.subr.bf16.mxu0 %v628
    %962 = vmatpush1.bf16.msra.mxu0 %v627
    %963 = vmatprep.subr.bf16.mxu0 %v632
    %964 = vmatpush1.bf16.msra.mxu0 %v631
    %965 = vmatprep.subr.bf16.mxu0 %v636
    %966 = vmatpush1.bf16.msra.mxu0 %v635
    %967 = vmatprep.subr.bf16.mxu0 %v640
    %968 = vmatpush1.bf16.msra.mxu0 %v639
    %969 = vmatprep.subr.bf16.mxu0 %v644
    %970 = vmatpush1.bf16.msra.mxu0 %v643
    %971 = vmatprep.subr.bf16.mxu0 %v648
    %972 = vmatpush1.bf16.msra.mxu0 %v647
    %973 = vmatprep.subr.bf16.mxu0 %v652
    %974 = vmatpush1.bf16.msra.mxu0 %v651
    %975 = vmatprep.subr.bf16.mxu0 %v656
    %976 = vmatpush1.bf16.msra.mxu0 %v655
    %977 = vmatprep.subr.bf16.mxu0 %v660
    %978 = vmatpush1.bf16.msra.mxu0 %v659
    %979 = vmatprep.subr.bf16.mxu0 %v664
    %980 = vmatpush1.bf16.msra.mxu0 %v663
    %981 = vmatprep.subr.bf16.mxu0 %v668
    %982 = vmatpush1.bf16.msra.mxu0 %v667
    %983 = vmatprep.subr.bf16.mxu0 %v672
    %984 = vmatpush1.bf16.msra.mxu0 %v671
    %985 = vmatprep.subr.bf16.mxu0 %v676
    %986 = vmatpush1.bf16.msra.mxu0 %v675
    %987 = vmatprep.mubr.bf16.mxu0 %v222
    %988 = vmatmul.mubr.bf16.gmra.mrb[0].mxu0 %v221
    %v989 = vpop.f32.mrb[0].mxu0
    %v990 = vadd.f32 %v200, %v989
    %v991 = vpop.f32.mrb[0].mxu0
    %v992 = vadd.f32 %v204, %v991
    %v993 = vpop.f32.mrb[0].mxu0
    %v994 = vadd.f32 %v200, %v993
    %v995 = vpop.f32.mrb[0].mxu0
    %v996 = vadd.f32 %v204, %v995
    %997 = vdwg.mxu0
    %998 = vmatprep.subr.bf16.mxu0 %v680
    %999 = vmatpush1.bf16.msra.mxu0 %v679
    %1000 = vmatprep.subr.bf16.mxu0 %v684
    %1001 = vmatpush1.bf16.msra.mxu0 %v683
    %1002 = vmatprep.subr.bf16.mxu0 %v688
    %1003 = vmatpush1.bf16.msra.mxu0 %v687
    %1004 = vmatprep.subr.bf16.mxu0 %v692
    %1005 = vmatpush1.bf16.msra.mxu0 %v691
    %1006 = vmatprep.subr.bf16.mxu0 %v696
    %1007 = vmatpush1.bf16.msra.mxu0 %v695
    %1008 = vmatprep.subr.bf16.mxu0 %v700
    %1009 = vmatpush1.bf16.msra.mxu0 %v699
    %1010 = vmatprep.subr.bf16.mxu0 %v704
    %1011 = vmatpush1.bf16.msra.mxu0 %v703
    %1012 = vmatprep.subr.bf16.mxu0 %v708
    %1013 = vmatpush1.bf16.msra.mxu0 %v707
    %1014 = vmatprep.subr.bf16.mxu0 %v712
    %1015 = vmatpush1.bf16.msra.mxu0 %v711
    %1016 = vmatprep.subr.bf16.mxu0 %v716
    %1017 = vmatpush1.bf16.msra.mxu0 %v715
    %1018 = vmatprep.subr.bf16.mxu0 %v720
    %1019 = vmatpush1.bf16.msra.mxu0 %v719
    %1020 = vmatprep.subr.bf16.mxu0 %v724
    %1021 = vmatpush1.bf16.msra.mxu0 %v723
    %1022 = vmatprep.subr.bf16.mxu0 %v728
    %1023 = vmatpush1.bf16.msra.mxu0 %v727
    %1024 = vmatprep.subr.bf16.mxu0 %v732
    %1025 = vmatpush1.bf16.msra.mxu0 %v731
    %1026 = vmatprep.subr.bf16.mxu0 %v736
    %1027 = vmatpush1.bf16.msra.mxu0 %v735
    %1028 = vmatprep.subr.bf16.mxu0 %v740
    %1029 = vmatpush1.bf16.msra.mxu0 %v739
    %1030 = vmatprep.mubr.bf16.mxu0 %v224
    %1031 = vmatmul.mubr.bf16.gmra.mrb[0].mxu0 %v223
    %v1032 = vpop.f32.mrb[0].mxu0
    %v1033 = vadd.f32 %v990, %v1032
    %v1034 = vpop.f32.mrb[0].mxu0
    %v1035 = vadd.f32 %v992, %v1034
    %v1036 = vpop.f32.mrb[0].mxu0
    %v1037 = vadd.f32 %v994, %v1036
    %v1038 = vpop.f32.mrb[0].mxu0
    %v1039 = vadd.f32 %v996, %v1038
    %1040 = vdwg.mxu0
    %v1041 = vmax.f32 %v947, 0.0
    %v1042 = vmax.f32 %v949, 0.0
    %v1043 = vmax.f32 %v1033, 0.0
    %v1044 = vmax.f32 %v1035, 0.0
    %v1045 = vmax.f32 %v951, 0.0
    %v1046 = vmax.f32 %v953, 0.0
    %v1047 = vmax.f32 %v1037, 0.0
    %v1048 = vmax.f32 %v1039, 0.0
    %v1049 = vpack.c.bf16 %v1045, %v1041
    %v1050 = vpack.c.bf16 %v1046, %v1042
    %v1051 = vpack.c.bf16 %v1047, %v1043
    %v1052 = vpack.c.bf16 %v1048, %v1044
    %v1053 = vld [vmem:[#allocation4] sm:$0xff]
    %v1054 = vld [vmem:[#allocation4 + $0x8] sm:$0xff]
    %v1055 = vld [vmem:[#allocation4 + $0x10] sm:$0xff]
    %v1056 = vld [vmem:[#allocation4 + $0x18] sm:$0xff]
    %v1057 = vld [vmem:[#allocation4 + $0x20] sm:$0xff]
    %v1058 = vld [vmem:[#allocation4 + $0x28] sm:$0xff]
    %v1059 = vld [vmem:[#allocation4 + $0x30] sm:$0xff]
    %v1060 = vld [vmem:[#allocation4 + $0x38] sm:$0xff]
    %v1061 = vld [vmem:[#allocation4 + $0x40] sm:$0xff]
    %v1062 = vld [vmem:[#allocation4 + $0x48] sm:$0xff]
    %v1063 = vld [vmem:[#allocation4 + $0x50] sm:$0xff]
    %v1064 = vld [vmem:[#allocation4 + $0x58] sm:$0xff]
    %v1065 = vld [vmem:[#allocation4 + $0x60] sm:$0xff]
    %v1066 = vld [vmem:[#allocation4 + $0x68] sm:$0xff]
    %v1067 = vld [vmem:[#allocation4 + $0x70] sm:$0xff]
    %v1068 = vld [vmem:[#allocation4 + $0x78] sm:$0xff]
    %v1069 = vld [vmem:[#allocation4 + $0x80] sm:$0xff]
    %v1070 = vld [vmem:[#allocation4 + $0x88] sm:$0xff]
    %v1071 = vld [vmem:[#allocation4 + $0x90] sm:$0xff]
    %v1072 = vld [vmem:[#allocation4 + $0x98] sm:$0xff]
    %v1073 = vld [vmem:[#allocation4 + $0xa0] sm:$0xff]
    %v1074 = vld [vmem:[#allocation4 + $0xa8] sm:$0xff]
    %v1075 = vld [vmem:[#allocation4 + $0xb0] sm:$0xff]
    %v1076 = vld [vmem:[#allocation4 + $0xb8] sm:$0xff]
    %v1077 = vld [vmem:[#allocation4 + $0xc0] sm:$0xff]
    %v1078 = vld [vmem:[#allocation4 + $0xc8] sm:$0xff]
    %v1079 = vld [vmem:[#allocation4 + $0xd0] sm:$0xff]
    %v1080 = vld [vmem:[#allocation4 + $0xd8] sm:$0xff]
    %v1081 = vld [vmem:[#allocation4 + $0xe0] sm:$0xff]
    %v1082 = vld [vmem:[#allocation4 + $0xe8] sm:$0xff]
    %v1083 = vld [vmem:[#allocation4 + $0xf0] sm:$0xff]
    %v1084 = vld [vmem:[#allocation4 + $0xf8] sm:$0xff]
    %v1085 = vld [vmem:[#allocation4 + $0x100] sm:$0xff]
    %v1086 = vld [vmem:[#allocation4 + $0x108] sm:$0xff]
    %v1087 = vld [vmem:[#allocation4 + $0x110] sm:$0xff]
    %v1088 = vld [vmem:[#allocation4 + $0x118] sm:$0xff]
    %v1089 = vld [vmem:[#allocation4 + $0x120] sm:$0xff]
    %v1090 = vld [vmem:[#allocation4 + $0x128] sm:$0xff]
    %v1091 = vld [vmem:[#allocation4 + $0x130] sm:$0xff]
    %v1092 = vld [vmem:[#allocation4 + $0x138] sm:$0xff]
    %v1093 = vld [vmem:[#allocation4 + $0x140] sm:$0xff]
    %v1094 = vld [vmem:[#allocation4 + $0x148] sm:$0xff]
    %v1095 = vld [vmem:[#allocation4 + $0x150] sm:$0xff]
    %v1096 = vld [vmem:[#allocation4 + $0x158] sm:$0xff]
    %v1097 = vld [vmem:[#allocation4 + $0x160] sm:$0xff]
    %v1098 = vld [vmem:[#allocation4 + $0x168] sm:$0xff]
    %v1099 = vld [vmem:[#allocation4 + $0x170] sm:$0xff]
    %v1100 = vld [vmem:[#allocation4 + $0x178] sm:$0xff]
    %v1101 = vld [vmem:[#allocation4 + $0x180] sm:$0xff]
    %v1102 = vld [vmem:[#allocation4 + $0x188] sm:$0xff]
    %v1103 = vld [vmem:[#allocation4 + $0x190] sm:$0xff]
    %v1104 = vld [vmem:[#allocation4 + $0x198] sm:$0xff]
    %v1105 = vld [vmem:[#allocation4 + $0x1a0] sm:$0xff]
    %v1106 = vld [vmem:[#allocation4 + $0x1a8] sm:$0xff]
    %v1107 = vld [vmem:[#allocation4 + $0x1b0] sm:$0xff]
    %v1108 = vld [vmem:[#allocation4 + $0x1b8] sm:$0xff]
    %v1109 = vld [vmem:[#allocation4 + $0x1c0] sm:$0xff]
    %v1110 = vld [vmem:[#allocation4 + $0x1c8] sm:$0xff]
    %v1111 = vld [vmem:[#allocation4 + $0x1d0] sm:$0xff]
    %v1112 = vld [vmem:[#allocation4 + $0x1d8] sm:$0xff]
    %v1113 = vld [vmem:[#allocation4 + $0x1e0] sm:$0xff]
    %v1114 = vld [vmem:[#allocation4 + $0x1e8] sm:$0xff]
    %v1115 = vld [vmem:[#allocation4 + $0x1f0] sm:$0xff]
    %v1116 = vld [vmem:[#allocation4 + $0x1f8] sm:$0xff]
    %v1117 = vld [vmem:[#allocation4 + $0x200] sm:$0xff]
    %v1118 = vld [vmem:[#allocation4 + $0x208] sm:$0xff]
    %v1119 = vld [vmem:[#allocation4 + $0x210] sm:$0xff]
    %v1120 = vld [vmem:[#allocation4 + $0x218] sm:$0xff]
    %v1121 = vld [vmem:[#allocation4 + $0x220] sm:$0xff]
    %v1122 = vld [vmem:[#allocation4 + $0x228] sm:$0xff]
    %v1123 = vld [vmem:[#allocation4 + $0x230] sm:$0xff]
    %v1124 = vld [vmem:[#allocation4 + $0x238] sm:$0xff]
    %v1125 = vld [vmem:[#allocation4 + $0x240] sm:$0xff]
    %v1126 = vld [vmem:[#allocation4 + $0x248] sm:$0xff]
    %v1127 = vld [vmem:[#allocation4 + $0x250] sm:$0xff]
    %v1128 = vld [vmem:[#allocation4 + $0x258] sm:$0xff]
    %v1129 = vld [vmem:[#allocation4 + $0x260] sm:$0xff]
    %v1130 = vld [vmem:[#allocation4 + $0x268] sm:$0xff]
    %v1131 = vld [vmem:[#allocation4 + $0x270] sm:$0xff]
    %v1132 = vld [vmem:[#allocation4 + $0x278] sm:$0xff]
    %v1133 = vld [vmem:[#allocation4 + $0x280] sm:$0xff]
    %v1134 = vld [vmem:[#allocation4 + $0x288] sm:$0xff]
    %v1135 = vld [vmem:[#allocation4 + $0x290] sm:$0xff]
    %v1136 = vld [vmem:[#allocation4 + $0x298] sm:$0xff]
    %v1137 = vld [vmem:[#allocation4 + $0x2a0] sm:$0xff]
    %v1138 = vld [vmem:[#allocation4 + $0x2a8] sm:$0xff]
    %v1139 = vld [vmem:[#allocation4 + $0x2b0] sm:$0xff]
    %v1140 = vld [vmem:[#allocation4 + $0x2b8] sm:$0xff]
    %v1141 = vld [vmem:[#allocation4 + $0x2c0] sm:$0xff]
    %v1142 = vld [vmem:[#allocation4 + $0x2c8] sm:$0xff]
    %v1143 = vld [vmem:[#allocation4 + $0x2d0] sm:$0xff]
    %v1144 = vld [vmem:[#allocation4 + $0x2d8] sm:$0xff]
    %v1145 = vld [vmem:[#allocation4 + $0x2e0] sm:$0xff]
    %v1146 = vld [vmem:[#allocation4 + $0x2e8] sm:$0xff]
    %v1147 = vld [vmem:[#allocation4 + $0x2f0] sm:$0xff]
    %v1148 = vld [vmem:[#allocation4 + $0x2f8] sm:$0xff]
    %v1149 = vld [vmem:[#allocation4 + $0x300] sm:$0xff]
    %v1150 = vld [vmem:[#allocation4 + $0x308] sm:$0xff]
    %v1151 = vld [vmem:[#allocation4 + $0x310] sm:$0xff]
    %v1152 = vld [vmem:[#allocation4 + $0x318] sm:$0xff]
    %v1153 = vld [vmem:[#allocation4 + $0x320] sm:$0xff]
    %v1154 = vld [vmem:[#allocation4 + $0x328] sm:$0xff]
    %v1155 = vld [vmem:[#allocation4 + $0x330] sm:$0xff]
    %v1156 = vld [vmem:[#allocation4 + $0x338] sm:$0xff]
    %v1157 = vld [vmem:[#allocation4 + $0x340] sm:$0xff]
    %v1158 = vld [vmem:[#allocation4 + $0x348] sm:$0xff]
    %v1159 = vld [vmem:[#allocation4 + $0x350] sm:$0xff]
    %v1160 = vld [vmem:[#allocation4 + $0x358] sm:$0xff]
    %v1161 = vld [vmem:[#allocation4 + $0x360] sm:$0xff]
    %v1162 = vld [vmem:[#allocation4 + $0x368] sm:$0xff]
    %v1163 = vld [vmem:[#allocation4 + $0x370] sm:$0xff]
    %v1164 = vld [vmem:[#allocation4 + $0x378] sm:$0xff]
    %v1165 = vld [vmem:[#allocation4 + $0x380] sm:$0xff]
    %v1166 = vld [vmem:[#allocation4 + $0x388] sm:$0xff]
    %v1167 = vld [vmem:[#allocation4 + $0x390] sm:$0xff]
    %v1168 = vld [vmem:[#allocation4 + $0x398] sm:$0xff]
    %v1169 = vld [vmem:[#allocation4 + $0x3a0] sm:$0xff]
    %v1170 = vld [vmem:[#allocation4 + $0x3a8] sm:$0xff]
    %v1171 = vld [vmem:[#allocation4 + $0x3b0] sm:$0xff]
    %v1172 = vld [vmem:[#allocation4 + $0x3b8] sm:$0xff]
    %v1173 = vld [vmem:[#allocation4 + $0x3c0] sm:$0xff]
    %v1174 = vld [vmem:[#allocation4 + $0x3c8] sm:$0xff]
    %v1175 = vld [vmem:[#allocation4 + $0x3d0] sm:$0xff]
    %v1176 = vld [vmem:[#allocation4 + $0x3d8] sm:$0xff]
    %v1177 = vld [vmem:[#allocation4 + $0x3e0] sm:$0xff]
    %v1178 = vld [vmem:[#allocation4 + $0x3e8] sm:$0xff]
    %v1179 = vld [vmem:[#allocation4 + $0x3f0] sm:$0xff]
    %v1180 = vld [vmem:[#allocation4 + $0x3f8] sm:$0xff]
    %v1181 = vld [vmem:[%s4] sm:$0xf]
    %v1183 = vlaneseq
    %v1184 = vshrl.u32 %v1183, 7
    %v1185 = vsub.s32 0, %v1184
    %v1186 = vrot.slane %v1181, %v1185
    %v1187 = vlaneseq
    %v1188 = vshrl.u32 %v1187, 7
    %v1189 = vsub.s32 1, %v1188
    %v1190 = vrot.slane %v1181, %v1189
    %v1191 = vlaneseq
    %v1192 = vshrl.u32 %v1191, 7
    %v1193 = vsub.s32 2, %v1192
    %v1194 = vrot.slane %v1181, %v1193
    %v1195 = vlaneseq
    %v1196 = vshrl.u32 %v1195, 7
    %v1197 = vsub.s32 3, %v1196
    %v1198 = vrot.slane %v1181, %v1197
    %v1331 = vunpack.c.l.b16 %v1053
    %v1332 = vunpack.c.h.b16 %v1053
    %v1333 = vunpack.c.l.b16 %v1054
    %v1334 = vunpack.c.h.b16 %v1054
    %v1335 = vunpack.c.l.b16 %v1055
    %v1336 = vunpack.c.h.b16 %v1055
    %v1337 = vunpack.c.l.b16 %v1056
    %v1338 = vunpack.c.h.b16 %v1056
    %v1339 = vunpack.c.l.b16 %v1057
    %v1340 = vunpack.c.h.b16 %v1057
    %v1341 = vunpack.c.l.b16 %v1058
    %v1342 = vunpack.c.h.b16 %v1058
    %v1343 = vunpack.c.l.b16 %v1059
    %v1344 = vunpack.c.h.b16 %v1059
    %v1345 = vunpack.c.l.b16 %v1060
    %v1346 = vunpack.c.h.b16 %v1060
    %v1347 = vunpack.c.l.b16 %v1061
    %v1348 = vunpack.c.h.b16 %v1061
    %v1349 = vunpack.c.l.b16 %v1062
    %v1350 = vunpack.c.h.b16 %v1062
    %v1351 = vunpack.c.l.b16 %v1063
    %v1352 = vunpack.c.h.b16 %v1063
    %v1353 = vunpack.c.l.b16 %v1064
    %v1354 = vunpack.c.h.b16 %v1064
    %v1355 = vunpack.c.l.b16 %v1065
    %v1356 = vunpack.c.h.b16 %v1065
    %v1357 = vunpack.c.l.b16 %v1066
    %v1358 = vunpack.c.h.b16 %v1066
    %v1359 = vunpack.c.l.b16 %v1067
    %v1360 = vunpack.c.h.b16 %v1067
    %v1361 = vunpack.c.l.b16 %v1068
    %v1362 = vunpack.c.h.b16 %v1068
    %v1363 = vunpack.c.l.b16 %v1069
    %v1364 = vunpack.c.h.b16 %v1069
    %v1365 = vunpack.c.l.b16 %v1070
    %v1366 = vunpack.c.h.b16 %v1070
    %v1367 = vunpack.c.l.b16 %v1071
    %v1368 = vunpack.c.h.b16 %v1071
    %v1369 = vunpack.c.l.b16 %v1072
    %v1370 = vunpack.c.h.b16 %v1072
    %v1371 = vunpack.c.l.b16 %v1073
    %v1372 = vunpack.c.h.b16 %v1073
    %v1373 = vunpack.c.l.b16 %v1074
    %v1374 = vunpack.c.h.b16 %v1074
    %v1375 = vunpack.c.l.b16 %v1075
    %v1376 = vunpack.c.h.b16 %v1075
    %v1377 = vunpack.c.l.b16 %v1076
    %v1378 = vunpack.c.h.b16 %v1076
    %v1379 = vunpack.c.l.b16 %v1077
    %v1380 = vunpack.c.h.b16 %v1077
    %v1381 = vunpack.c.l.b16 %v1078
    %v1382 = vunpack.c.h.b16 %v1078
    %v1383 = vunpack.c.l.b16 %v1079
    %v1384 = vunpack.c.h.b16 %v1079
    %v1385 = vunpack.c.l.b16 %v1080
    %v1386 = vunpack.c.h.b16 %v1080
    %v1387 = vunpack.c.l.b16 %v1081
    %v1388 = vunpack.c.h.b16 %v1081
    %v1389 = vunpack.c.l.b16 %v1082
    %v1390 = vunpack.c.h.b16 %v1082
    %v1391 = vunpack.c.l.b16 %v1083
    %v1392 = vunpack.c.h.b16 %v1083
    %v1393 = vunpack.c.l.b16 %v1084
    %v1394 = vunpack.c.h.b16 %v1084
    %v1395 = vunpack.c.l.b16 %v1085
    %v1396 = vunpack.c.h.b16 %v1085
    %v1397 = vunpack.c.l.b16 %v1086
    %v1398 = vunpack.c.h.b16 %v1086
    %v1399 = vunpack.c.l.b16 %v1087
    %v1400 = vunpack.c.h.b16 %v1087
    %v1401 = vunpack.c.l.b16 %v1088
    %v1402 = vunpack.c.h.b16 %v1088
    %v1403 = vunpack.c.l.b16 %v1089
    %v1404 = vunpack.c.h.b16 %v1089
    %v1405 = vunpack.c.l.b16 %v1090
    %v1406 = vunpack.c.h.b16 %v1090
    %v1407 = vunpack.c.l.b16 %v1091
    %v1408 = vunpack.c.h.b16 %v1091
    %v1409 = vunpack.c.l.b16 %v1092
    %v1410 = vunpack.c.h.b16 %v1092
    %v1411 = vunpack.c.l.b16 %v1093
    %v1412 = vunpack.c.h.b16 %v1093
    %v1413 = vunpack.c.l.b16 %v1094
    %v1414 = vunpack.c.h.b16 %v1094
    %v1415 = vunpack.c.l.b16 %v1095
    %v1416 = vunpack.c.h.b16 %v1095
    %v1417 = vunpack.c.l.b16 %v1096
    %v1418 = vunpack.c.h.b16 %v1096
    %v1419 = vunpack.c.l.b16 %v1097
    %v1420 = vunpack.c.h.b16 %v1097
    %v1421 = vunpack.c.l.b16 %v1098
    %v1422 = vunpack.c.h.b16 %v1098
    %v1423 = vunpack.c.l.b16 %v1099
    %v1424 = vunpack.c.h.b16 %v1099
    %v1425 = vunpack.c.l.b16 %v1100
    %v1426 = vunpack.c.h.b16 %v1100
    %v1427 = vunpack.c.l.b16 %v1101
    %v1428 = vunpack.c.h.b16 %v1101
    %v1429 = vunpack.c.l.b16 %v1102
    %v1430 = vunpack.c.h.b16 %v1102
    %v1431 = vunpack.c.l.b16 %v1103
    %v1432 = vunpack.c.h.b16 %v1103
    %v1433 = vunpack.c.l.b16 %v1104
    %v1434 = vunpack.c.h.b16 %v1104
    %v1435 = vunpack.c.l.b16 %v1105
    %v1436 = vunpack.c.h.b16 %v1105
    %v1437 = vunpack.c.l.b16 %v1106
    %v1438 = vunpack.c.h.b16 %v1106
    %v1439 = vunpack.c.l.b16 %v1107
    %v1440 = vunpack.c.h.b16 %v1107
    %v1441 = vunpack.c.l.b16 %v1108
    %v1442 = vunpack.c.h.b16 %v1108
    %v1443 = vunpack.c.l.b16 %v1109
    %v1444 = vunpack.c.h.b16 %v1109
    %v1445 = vunpack.c.l.b16 %v1110
    %v1446 = vunpack.c.h.b16 %v1110
    %v1447 = vunpack.c.l.b16 %v1111
    %v1448 = vunpack.c.h.b16 %v1111
    %v1449 = vunpack.c.l.b16 %v1112
    %v1450 = vunpack.c.h.b16 %v1112
    %v1451 = vunpack.c.l.b16 %v1113
    %v1452 = vunpack.c.h.b16 %v1113
    %v1453 = vunpack.c.l.b16 %v1114
    %v1454 = vunpack.c.h.b16 %v1114
    %v1455 = vunpack.c.l.b16 %v1115
    %v1456 = vunpack.c.h.b16 %v1115
    %v1457 = vunpack.c.l.b16 %v1116
    %v1458 = vunpack.c.h.b16 %v1116
    %v1459 = vunpack.c.l.b16 %v1117
    %v1460 = vunpack.c.h.b16 %v1117
    %v1461 = vunpack.c.l.b16 %v1118
    %v1462 = vunpack.c.h.b16 %v1118
    %v1463 = vunpack.c.l.b16 %v1119
    %v1464 = vunpack.c.h.b16 %v1119
    %v1465 = vunpack.c.l.b16 %v1120
    %v1466 = vunpack.c.h.b16 %v1120
    %v1467 = vunpack.c.l.b16 %v1121
    %v1468 = vunpack.c.h.b16 %v1121
    %v1469 = vunpack.c.l.b16 %v1122
    %v1470 = vunpack.c.h.b16 %v1122
    %v1471 = vunpack.c.l.b16 %v1123
    %v1472 = vunpack.c.h.b16 %v1123
    %v1473 = vunpack.c.l.b16 %v1124
    %v1474 = vunpack.c.h.b16 %v1124
    %v1475 = vunpack.c.l.b16 %v1125
    %v1476 = vunpack.c.h.b16 %v1125
    %v1477 = vunpack.c.l.b16 %v1126
    %v1478 = vunpack.c.h.b16 %v1126
    %v1479 = vunpack.c.l.b16 %v1127
    %v1480 = vunpack.c.h.b16 %v1127
    %v1481 = vunpack.c.l.b16 %v1128
    %v1482 = vunpack.c.h.b16 %v1128
    %v1483 = vunpack.c.l.b16 %v1129
    %v1484 = vunpack.c.h.b16 %v1129
    %v1485 = vunpack.c.l.b16 %v1130
    %v1486 = vunpack.c.h.b16 %v1130
    %v1487 = vunpack.c.l.b16 %v1131
    %v1488 = vunpack.c.h.b16 %v1131
    %v1489 = vunpack.c.l.b16 %v1132
    %v1490 = vunpack.c.h.b16 %v1132
    %v1491 = vunpack.c.l.b16 %v1133
    %v1492 = vunpack.c.h.b16 %v1133
    %v1493 = vunpack.c.l.b16 %v1134
    %v1494 = vunpack.c.h.b16 %v1134
    %v1495 = vunpack.c.l.b16 %v1135
    %v1496 = vunpack.c.h.b16 %v1135
    %v1497 = vunpack.c.l.b16 %v1136
    %v1498 = vunpack.c.h.b16 %v1136
    %v1499 = vunpack.c.l.b16 %v1137
    %v1500 = vunpack.c.h.b16 %v1137
    %v1501 = vunpack.c.l.b16 %v1138
    %v1502 = vunpack.c.h.b16 %v1138
    %v1503 = vunpack.c.l.b16 %v1139
    %v1504 = vunpack.c.h.b16 %v1139
    %v1505 = vunpack.c.l.b16 %v1140
    %v1506 = vunpack.c.h.b16 %v1140
    %v1507 = vunpack.c.l.b16 %v1141
    %v1508 = vunpack.c.h.b16 %v1141
    %v1509 = vunpack.c.l.b16 %v1142
    %v1510 = vunpack.c.h.b16 %v1142
    %v1511 = vunpack.c.l.b16 %v1143
    %v1512 = vunpack.c.h.b16 %v1143
    %v1513 = vunpack.c.l.b16 %v1144
    %v1514 = vunpack.c.h.b16 %v1144
    %v1515 = vunpack.c.l.b16 %v1145
    %v1516 = vunpack.c.h.b16 %v1145
    %v1517 = vunpack.c.l.b16 %v1146
    %v1518 = vunpack.c.h.b16 %v1146
    %v1519 = vunpack.c.l.b16 %v1147
    %v1520 = vunpack.c.h.b16 %v1147
    %v1521 = vunpack.c.l.b16 %v1148
    %v1522 = vunpack.c.h.b16 %v1148
    %v1523 = vunpack.c.l.b16 %v1149
    %v1524 = vunpack.c.h.b16 %v1149
    %v1525 = vunpack.c.l.b16 %v1150
    %v1526 = vunpack.c.h.b16 %v1150
    %v1527 = vunpack.c.l.b16 %v1151
    %v1528 = vunpack.c.h.b16 %v1151
    %v1529 = vunpack.c.l.b16 %v1152
    %v1530 = vunpack.c.h.b16 %v1152
    %v1531 = vunpack.c.l.b16 %v1153
    %v1532 = vunpack.c.h.b16 %v1153
    %v1533 = vunpack.c.l.b16 %v1154
    %v1534 = vunpack.c.h.b16 %v1154
    %v1535 = vunpack.c.l.b16 %v1155
    %v1536 = vunpack.c.h.b16 %v1155
    %v1537 = vunpack.c.l.b16 %v1156
    %v1538 = vunpack.c.h.b16 %v1156
    %v1539 = vunpack.c.l.b16 %v1157
    %v1540 = vunpack.c.h.b16 %v1157
    %v1541 = vunpack.c.l.b16 %v1158
    %v1542 = vunpack.c.h.b16 %v1158
    %v1543 = vunpack.c.l.b16 %v1159
    %v1544 = vunpack.c.h.b16 %v1159
    %v1545 = vunpack.c.l.b16 %v1160
    %v1546 = vunpack.c.h.b16 %v1160
    %v1547 = vunpack.c.l.b16 %v1161
    %v1548 = vunpack.c.h.b16 %v1161
    %v1549 = vunpack.c.l.b16 %v1162
    %v1550 = vunpack.c.h.b16 %v1162
    %v1551 = vunpack.c.l.b16 %v1163
    %v1552 = vunpack.c.h.b16 %v1163
    %v1553 = vunpack.c.l.b16 %v1164
    %v1554 = vunpack.c.h.b16 %v1164
    %v1555 = vunpack.c.l.b16 %v1165
    %v1556 = vunpack.c.h.b16 %v1165
    %v1557 = vunpack.c.l.b16 %v1166
    %v1558 = vunpack.c.h.b16 %v1166
    %v1559 = vunpack.c.l.b16 %v1167
    %v1560 = vunpack.c.h.b16 %v1167
    %v1561 = vunpack.c.l.b16 %v1168
    %v1562 = vunpack.c.h.b16 %v1168
    %v1563 = vunpack.c.l.b16 %v1169
    %v1564 = vunpack.c.h.b16 %v1169
    %v1565 = vunpack.c.l.b16 %v1170
    %v1566 = vunpack.c.h.b16 %v1170
    %v1567 = vunpack.c.l.b16 %v1171
    %v1568 = vunpack.c.h.b16 %v1171
    %v1569 = vunpack.c.l.b16 %v1172
    %v1570 = vunpack.c.h.b16 %v1172
    %v1571 = vunpack.c.l.b16 %v1173
    %v1572 = vunpack.c.h.b16 %v1173
    %v1573 = vunpack.c.l.b16 %v1174
    %v1574 = vunpack.c.h.b16 %v1174
    %v1575 = vunpack.c.l.b16 %v1175
    %v1576 = vunpack.c.h.b16 %v1175
    %v1577 = vunpack.c.l.b16 %v1176
    %v1578 = vunpack.c.h.b16 %v1176
    %v1579 = vunpack.c.l.b16 %v1177
    %v1580 = vunpack.c.h.b16 %v1177
    %v1581 = vunpack.c.l.b16 %v1178
    %v1582 = vunpack.c.h.b16 %v1178
    %v1583 = vunpack.c.l.b16 %v1179
    %v1584 = vunpack.c.h.b16 %v1179
    %v1585 = vunpack.c.l.b16 %v1180
    %v1586 = vunpack.c.h.b16 %v1180
    %v1587 = vpack.c.b16 %v1335, %v1331
    %v1588 = vpack.c.b16 %v1336, %v1332
    %v1589 = vpack.c.b16 %v1337, %v1333
    %v1590 = vpack.c.b16 %v1338, %v1334
    %v1591 = vpack.c.b16 %v1343, %v1339
    %v1592 = vpack.c.b16 %v1344, %v1340
    %v1593 = vpack.c.b16 %v1345, %v1341
    %v1594 = vpack.c.b16 %v1346, %v1342
    %v1595 = vpack.c.b16 %v1351, %v1347
    %v1596 = vpack.c.b16 %v1352, %v1348
    %v1597 = vpack.c.b16 %v1353, %v1349
    %v1598 = vpack.c.b16 %v1354, %v1350
    %v1599 = vpack.c.b16 %v1359, %v1355
    %v1600 = vpack.c.b16 %v1360, %v1356
    %v1601 = vpack.c.b16 %v1361, %v1357
    %v1602 = vpack.c.b16 %v1362, %v1358
    %v1603 = vpack.c.b16 %v1367, %v1363
    %v1604 = vpack.c.b16 %v1368, %v1364
    %v1605 = vpack.c.b16 %v1369, %v1365
    %v1606 = vpack.c.b16 %v1370, %v1366
    %v1607 = vpack.c.b16 %v1375, %v1371
    %v1608 = vpack.c.b16 %v1376, %v1372
    %v1609 = vpack.c.b16 %v1377, %v1373
    %v1610 = vpack.c.b16 %v1378, %v1374
    %v1611 = vpack.c.b16 %v1383, %v1379
    %v1612 = vpack.c.b16 %v1384, %v1380
    %v1613 = vpack.c.b16 %v1385, %v1381
    %v1614 = vpack.c.b16 %v1386, %v1382
    %v1615 = vpack.c.b16 %v1391, %v1387
    %v1616 = vpack.c.b16 %v1392, %v1388
    %v1617 = vpack.c.b16 %v1393, %v1389
    %v1618 = vpack.c.b16 %v1394, %v1390
    %v1619 = vpack.c.b16 %v1399, %v1395
    %v1620 = vpack.c.b16 %v1400, %v1396
    %v1621 = vpack.c.b16 %v1401, %v1397
    %v1622 = vpack.c.b16 %v1402, %v1398
    %v1623 = vpack.c.b16 %v1407, %v1403
    %v1624 = vpack.c.b16 %v1408, %v1404
    %v1625 = vpack.c.b16 %v1409, %v1405
    %v1626 = vpack.c.b16 %v1410, %v1406
    %v1627 = vpack.c.b16 %v1415, %v1411
    %v1628 = vpack.c.b16 %v1416, %v1412
    %v1629 = vpack.c.b16 %v1417, %v1413
    %v1630 = vpack.c.b16 %v1418, %v1414
    %v1631 = vpack.c.b16 %v1423, %v1419
    %v1632 = vpack.c.b16 %v1424, %v1420
    %v1633 = vpack.c.b16 %v1425, %v1421
    %v1634 = vpack.c.b16 %v1426, %v1422
    %v1635 = vpack.c.b16 %v1431, %v1427
    %v1636 = vpack.c.b16 %v1432, %v1428
    %v1637 = vpack.c.b16 %v1433, %v1429
    %v1638 = vpack.c.b16 %v1434, %v1430
    %v1639 = vpack.c.b16 %v1439, %v1435
    %v1640 = vpack.c.b16 %v1440, %v1436
    %v1641 = vpack.c.b16 %v1441, %v1437
    %v1642 = vpack.c.b16 %v1442, %v1438
    %v1643 = vpack.c.b16 %v1447, %v1443
    %v1644 = vpack.c.b16 %v1448, %v1444
    %v1645 = vpack.c.b16 %v1449, %v1445
    %v1646 = vpack.c.b16 %v1450, %v1446
    %v1647 = vpack.c.b16 %v1455, %v1451
    %v1648 = vpack.c.b16 %v1456, %v1452
    %v1649 = vpack.c.b16 %v1457, %v1453
    %v1650 = vpack.c.b16 %v1458, %v1454
    %v1651 = vpack.c.b16 %v1463, %v1459
    %v1652 = vpack.c.b16 %v1464, %v1460
    %v1653 = vpack.c.b16 %v1465, %v1461
    %v1654 = vpack.c.b16 %v1466, %v1462
    %v1655 = vpack.c.b16 %v1471, %v1467
    %v1656 = vpack.c.b16 %v1472, %v1468
    %v1657 = vpack.c.b16 %v1473, %v1469
    %v1658 = vpack.c.b16 %v1474, %v1470
    %v1659 = vpack.c.b16 %v1479, %v1475
    %v1660 = vpack.c.b16 %v1480, %v1476
    %v1661 = vpack.c.b16 %v1481, %v1477
    %v1662 = vpack.c.b16 %v1482, %v1478
    %v1663 = vpack.c.b16 %v1487, %v1483
    %v1664 = vpack.c.b16 %v1488, %v1484
    %v1665 = vpack.c.b16 %v1489, %v1485
    %v1666 = vpack.c.b16 %v1490, %v1486
    %v1667 = vpack.c.b16 %v1495, %v1491
    %v1668 = vpack.c.b16 %v1496, %v1492
    %v1669 = vpack.c.b16 %v1497, %v1493
    %v1670 = vpack.c.b16 %v1498, %v1494
    %v1671 = vpack.c.b16 %v1503, %v1499
    %v1672 = vpack.c.b16 %v1504, %v1500
    %v1673 = vpack.c.b16 %v1505, %v1501
    %v1674 = vpack.c.b16 %v1506, %v1502
    %v1675 = vpack.c.b16 %v1511, %v1507
    %v1676 = vpack.c.b16 %v1512, %v1508
    %v1677 = vpack.c.b16 %v1513, %v1509
    %v1678 = vpack.c.b16 %v1514, %v1510
    %v1679 = vpack.c.b16 %v1519, %v1515
    %v1680 = vpack.c.b16 %v1520, %v1516
    %v1681 = vpack.c.b16 %v1521, %v1517
    %v1682 = vpack.c.b16 %v1522, %v1518
    %v1683 = vpack.c.b16 %v1527, %v1523
    %v1684 = vpack.c.b16 %v1528, %v1524
    %v1685 = vpack.c.b16 %v1529, %v1525
    %v1686 = vpack.c.b16 %v1530, %v1526
    %v1687 = vpack.c.b16 %v1535, %v1531
    %v1688 = vpack.c.b16 %v1536, %v1532
    %v1689 = vpack.c.b16 %v1537, %v1533
    %v1690 = vpack.c.b16 %v1538, %v1534
    %v1691 = vpack.c.b16 %v1543, %v1539
    %v1692 = vpack.c.b16 %v1544, %v1540
    %v1693 = vpack.c.b16 %v1545, %v1541
    %v1694 = vpack.c.b16 %v1546, %v1542
    %v1695 = vpack.c.b16 %v1551, %v1547
    %v1696 = vpack.c.b16 %v1552, %v1548
    %v1697 = vpack.c.b16 %v1553, %v1549
    %v1698 = vpack.c.b16 %v1554, %v1550
    %v1699 = vpack.c.b16 %v1559, %v1555
    %v1700 = vpack.c.b16 %v1560, %v1556
    %v1701 = vpack.c.b16 %v1561, %v1557
    %v1702 = vpack.c.b16 %v1562, %v1558
    %v1703 = vpack.c.b16 %v1567, %v1563
    %v1704 = vpack.c.b16 %v1568, %v1564
    %v1705 = vpack.c.b16 %v1569, %v1565
    %v1706 = vpack.c.b16 %v1570, %v1566
    %v1707 = vpack.c.b16 %v1575, %v1571
    %v1708 = vpack.c.b16 %v1576, %v1572
    %v1709 = vpack.c.b16 %v1577, %v1573
    %v1710 = vpack.c.b16 %v1578, %v1574
    %v1711 = vpack.c.b16 %v1583, %v1579
    %v1712 = vpack.c.b16 %v1584, %v1580
    %v1713 = vpack.c.b16 %v1585, %v1581
    %v1714 = vpack.c.b16 %v1586, %v1582
    %1843 = vmatprep.subr.bf16.mxu0 %v1588
    %1844 = vmatpush1.bf16.msra.mxu0 %v1587
    %1845 = vmatprep.subr.bf16.mxu0 %v1592
    %1846 = vmatpush1.bf16.msra.mxu0 %v1591
    %1847 = vmatprep.subr.bf16.mxu0 %v1596
    %1848 = vmatpush1.bf16.msra.mxu0 %v1595
    %1849 = vmatprep.subr.bf16.mxu0 %v1600
    %1850 = vmatpush1.bf16.msra.mxu0 %v1599
    %1851 = vmatprep.subr.bf16.mxu0 %v1604
    %1852 = vmatpush1.bf16.msra.mxu0 %v1603
    %1853 = vmatprep.subr.bf16.mxu0 %v1608
    %1854 = vmatpush1.bf16.msra.mxu0 %v1607
    %1855 = vmatprep.subr.bf16.mxu0 %v1612
    %1856 = vmatpush1.bf16.msra.mxu0 %v1611
    %1857 = vmatprep.subr.bf16.mxu0 %v1616
    %1858 = vmatpush1.bf16.msra.mxu0 %v1615
    %1859 = vmatprep.subr.bf16.mxu0 %v1620
    %1860 = vmatpush1.bf16.msra.mxu0 %v1619
    %1861 = vmatprep.subr.bf16.mxu0 %v1624
    %1862 = vmatpush1.bf16.msra.mxu0 %v1623
    %1863 = vmatprep.subr.bf16.mxu0 %v1628
    %1864 = vmatpush1.bf16.msra.mxu0 %v1627
    %1865 = vmatprep.subr.bf16.mxu0 %v1632
    %1866 = vmatpush1.bf16.msra.mxu0 %v1631
    %1867 = vmatprep.subr.bf16.mxu0 %v1636
    %1868 = vmatpush1.bf16.msra.mxu0 %v1635
    %1869 = vmatprep.subr.bf16.mxu0 %v1640
    %1870 = vmatpush1.bf16.msra.mxu0 %v1639
    %1871 = vmatprep.subr.bf16.mxu0 %v1644
    %1872 = vmatpush1.bf16.msra.mxu0 %v1643
    %1873 = vmatprep.subr.bf16.mxu0 %v1648
    %1874 = vmatpush1.bf16.msra.mxu0 %v1647
    %1875 = vmatprep.mubr.bf16.mxu0 %v1050
    %1876 = vmatmul.mubr.bf16.gmra.mrb[0].mxu0 %v1049
    %v1877 = vpop.f32.mrb[0].mxu0
    %v1878 = vadd.f32 %v1186, %v1877
    %v1879 = vpop.f32.mrb[0].mxu0
    %v1880 = vadd.f32 %v1190, %v1879
    %v1881 = vpop.f32.mrb[0].mxu0
    %v1882 = vadd.f32 %v1186, %v1881
    %v1883 = vpop.f32.mrb[0].mxu0
    %v1884 = vadd.f32 %v1190, %v1883
    %1885 = vdwg.mxu0
    %1886 = vmatprep.subr.bf16.mxu0 %v1652
    %1887 = vmatpush1.bf16.msra.mxu0 %v1651
    %1888 = vmatprep.subr.bf16.mxu0 %v1656
    %1889 = vmatpush1.bf16.msra.mxu0 %v1655
    %1890 = vmatprep.subr.bf16.mxu0 %v1660
    %1891 = vmatpush1.bf16.msra.mxu0 %v1659
    %1892 = vmatprep.subr.bf16.mxu0 %v1664
    %1893 = vmatpush1.bf16.msra.mxu0 %v1663
    %1894 = vmatprep.subr.bf16.mxu0 %v1668
    %1895 = vmatpush1.bf16.msra.mxu0 %v1667
    %1896 = vmatprep.subr.bf16.mxu0 %v1672
    %1897 = vmatpush1.bf16.msra.mxu0 %v1671
    %1898 = vmatprep.subr.bf16.mxu0 %v1676
    %1899 = vmatpush1.bf16.msra.mxu0 %v1675
    %1900 = vmatprep.subr.bf16.mxu0 %v1680
    %1901 = vmatpush1.bf16.msra.mxu0 %v1679
    %1902 = vmatprep.subr.bf16.mxu0 %v1684
    %1903 = vmatpush1.bf16.msra.mxu0 %v1683
    %1904 = vmatprep.subr.bf16.mxu0 %v1688
    %1905 = vmatpush1.bf16.msra.mxu0 %v1687
    %1906 = vmatprep.subr.bf16.mxu0 %v1692
    %1907 = vmatpush1.bf16.msra.mxu0 %v1691
    %1908 = vmatprep.subr.bf16.mxu0 %v1696
    %1909 = vmatpush1.bf16.msra.mxu0 %v1695
    %1910 = vmatprep.subr.bf16.mxu0 %v1700
    %1911 = vmatpush1.bf16.msra.mxu0 %v1699
    %1912 = vmatprep.subr.bf16.mxu0 %v1704
    %1913 = vmatpush1.bf16.msra.mxu0 %v1703
    %1914 = vmatprep.subr.bf16.mxu0 %v1708
    %1915 = vmatpush1.bf16.msra.mxu0 %v1707
    %1916 = vmatprep.subr.bf16.mxu0 %v1712
    %1917 = vmatpush1.bf16.msra.mxu0 %v1711
    %1918 = vmatprep.mubr.bf16.mxu0 %v1052
    %1919 = vmatmul.mubr.bf16.gmra.mrb[0].mxu0 %v1051
    %v1920 = vpop.f32.mrb[0].mxu0
    %v1921 = vadd.f32 %v1878, %v1920
    %v1922 = vpop.f32.mrb[0].mxu0
    %v1923 = vadd.f32 %v1880, %v1922
    %v1924 = vpop.f32.mrb[0].mxu0
    %v1925 = vadd.f32 %v1882, %v1924
    %v1926 = vpop.f32.mrb[0].mxu0
    %v1927 = vadd.f32 %v1884, %v1926
    %1928 = vdwg.mxu0
    %1929 = vmatprep.subr.bf16.mxu0 %v1590
    %1930 = vmatpush1.bf16.msra.mxu0 %v1589
    %1931 = vmatprep.subr.bf16.mxu0 %v1594
    %1932 = vmatpush1.bf16.msra.mxu0 %v1593
    %1933 = vmatprep.subr.bf16.mxu0 %v1598
    %1934 = vmatpush1.bf16.msra.mxu0 %v1597
    %1935 = vmatprep.subr.bf16.mxu0 %v1602
    %1936 = vmatpush1.bf16.msra.mxu0 %v1601
    %1937 = vmatprep.subr.bf16.mxu0 %v1606
    %1938 = vmatpush1.bf16.msra.mxu0 %v1605
    %1939 = vmatprep.subr.bf16.mxu0 %v1610
    %1940 = vmatpush1.bf16.msra.mxu0 %v1609
    %1941 = vmatprep.subr.bf16.mxu0 %v1614
    %1942 = vmatpush1.bf16.msra.mxu0 %v1613
    %1943 = vmatprep.subr.bf16.mxu0 %v1618
    %1944 = vmatpush1.bf16.msra.mxu0 %v1617
    %1945 = vmatprep.subr.bf16.mxu0 %v1622
    %1946 = vmatpush1.bf16.msra.mxu0 %v1621
    %1947 = vmatprep.subr.bf16.mxu0 %v1626
    %1948 = vmatpush1.bf16.msra.mxu0 %v1625
    %1949 = vmatprep.subr.bf16.mxu0 %v1630
    %1950 = vmatpush1.bf16.msra.mxu0 %v1629
    %1951 = vmatprep.subr.bf16.mxu0 %v1634
    %1952 = vmatpush1.bf16.msra.mxu0 %v1633
    %1953 = vmatprep.subr.bf16.mxu0 %v1638
    %1954 = vmatpush1.bf16.msra.mxu0 %v1637
    %1955 = vmatprep.subr.bf16.mxu0 %v1642
    %1956 = vmatpush1.bf16.msra.mxu0 %v1641
    %1957 = vmatprep.subr.bf16.mxu0 %v1646
    %1958 = vmatpush1.bf16.msra.mxu0 %v1645
    %1959 = vmatprep.subr.bf16.mxu0 %v1650
    %1960 = vmatpush1.bf16.msra.mxu0 %v1649
    %1961 = vmatprep.mubr.bf16.mxu0 %v1050
    %1962 = vmatmul.mubr.bf16.gmra.mrb[0].mxu0 %v1049
    %v1963 = vpop.f32.mrb[0].mxu0
    %v1964 = vadd.f32 %v1194, %v1963
    %v1965 = vpop.f32.mrb[0].mxu0
    %v1966 = vadd.f32 %v1198, %v1965
    %v1967 = vpop.f32.mrb[0].mxu0
    %v1968 = vadd.f32 %v1194, %v1967
    %v1969 = vpop.f32.mrb[0].mxu0
    %v1970 = vadd.f32 %v1198, %v1969
    %1971 = vdwg.mxu0
    %1972 = vmatprep.subr.bf16.mxu0 %v1654
    %1973 = vmatpush1.bf16.msra.mxu0 %v1653
    %1974 = vmatprep.subr.bf16.mxu0 %v1658
    %1975 = vmatpush1.bf16.msra.mxu0 %v1657
    %1976 = vmatprep.subr.bf16.mxu0 %v1662
    %1977 = vmatpush1.bf16.msra.mxu0 %v1661
    %1978 = vmatprep.subr.bf16.mxu0 %v1666
    %1979 = vmatpush1.bf16.msra.mxu0 %v1665
    %1980 = vmatprep.subr.bf16.mxu0 %v1670
    %1981 = vmatpush1.bf16.msra.mxu0 %v1669
    %1982 = vmatprep.subr.bf16.mxu0 %v1674
    %1983 = vmatpush1.bf16.msra.mxu0 %v1673
    %1984 = vmatprep.subr.bf16.mxu0 %v1678
    %1985 = vmatpush1.bf16.msra.mxu0 %v1677
    %1986 = vmatprep.subr.bf16.mxu0 %v1682
    %1987 = vmatpush1.bf16.msra.mxu0 %v1681
    %1988 = vmatprep.subr.bf16.mxu0 %v1686
    %1989 = vmatpush1.bf16.msra.mxu0 %v1685
    %1990 = vmatprep.subr.bf16.mxu0 %v1690
    %1991 = vmatpush1.bf16.msra.mxu0 %v1689
    %1992 = vmatprep.subr.bf16.mxu0 %v1694
    %1993 = vmatpush1.bf16.msra.mxu0 %v1693
    %1994 = vmatprep.subr.bf16.mxu0 %v1698
    %1995 = vmatpush1.bf16.msra.mxu0 %v1697
    %1996 = vmatprep.subr.bf16.mxu0 %v1702
    %1997 = vmatpush1.bf16.msra.mxu0 %v1701
    %1998 = vmatprep.subr.bf16.mxu0 %v1706
    %1999 = vmatpush1.bf16.msra.mxu0 %v1705
    %2000 = vmatprep.subr.bf16.mxu0 %v1710
    %2001 = vmatpush1.bf16.msra.mxu0 %v1709
    %2002 = vmatprep.subr.bf16.mxu0 %v1714
    %2003 = vmatpush1.bf16.msra.mxu0 %v1713
    %2004 = vmatprep.mubr.bf16.mxu0 %v1052
    %2005 = vmatmul.mubr.bf16.gmra.mrb[0].mxu0 %v1051
    %v2006 = vpop.f32.mrb[0].mxu0
    %v2007 = vadd.f32 %v1964, %v2006
    %v2008 = vpop.f32.mrb[0].mxu0
    %v2009 = vadd.f32 %v1966, %v2008
    %v2010 = vpop.f32.mrb[0].mxu0
    %v2011 = vadd.f32 %v1968, %v2010
    %v2012 = vpop.f32.mrb[0].mxu0
    %v2013 = vadd.f32 %v1970, %v2012
    %2014 = vdwg.mxu0
    %v2015 = vmax.f32 %v1921, 0.0
    %v2016 = vmax.f32 %v1923, 0.0
    %v2017 = vmax.f32 %v2007, 0.0
    %v2018 = vmax.f32 %v2009, 0.0
    %v2019 = vmax.f32 %v1925, 0.0
    %v2020 = vmax.f32 %v1927, 0.0
    %v2021 = vmax.f32 %v2011, 0.0
    %v2022 = vmax.f32 %v2013, 0.0
    %v2023 = vpack.c.bf16 %v2019, %v2015
    %v2024 = vpack.c.bf16 %v2020, %v2016
    %v2025 = vpack.c.bf16 %v2021, %v2017
    %v2026 = vpack.c.bf16 %v2022, %v2018
    %v2027 = vld [vmem:[%s5] sm:$0xf]
    %v2028 = vld [vmem:[%s5 + $0x4] sm:$0xf]
    %v2029 = vld [vmem:[%s5 + $0x8] sm:$0xf]
    %v2030 = vld [vmem:[%s5 + $0xc] sm:$0xf]
    %v2031 = vld [vmem:[%s5 + $0x10] sm:$0xf]
    %v2032 = vld [vmem:[%s5 + $0x14] sm:$0xf]
    %v2033 = vld [vmem:[%s5 + $0x18] sm:$0xf]
    %v2034 = vld [vmem:[%s5 + $0x1c] sm:$0xf]
    %v2035 = vld [vmem:[%s5 + $0x20] sm:$0xf]
    %v2036 = vld [vmem:[%s5 + $0x24] sm:$0xf]
    %v2037 = vld [vmem:[%s5 + $0x28] sm:$0xf]
    %v2038 = vld [vmem:[%s5 + $0x2c] sm:$0xf]
    %v2039 = vld [vmem:[%s5 + $0x30] sm:$0xf]
    %v2040 = vld [vmem:[%s5 + $0x34] sm:$0xf]
    %v2041 = vld [vmem:[%s5 + $0x38] sm:$0xf]
    %v2042 = vld [vmem:[%s5 + $0x3c] sm:$0xf]
    %v2043 = vld [vmem:[%s5 + $0x40] sm:$0xf]
    %v2044 = vld [vmem:[%s5 + $0x44] sm:$0xf]
    %v2045 = vld [vmem:[%s5 + $0x48] sm:$0xf]
    %v2046 = vld [vmem:[%s5 + $0x4c] sm:$0xf]
    %v2047 = vld [vmem:[%s5 + $0x50] sm:$0xf]
    %v2048 = vld [vmem:[%s5 + $0x54] sm:$0xf]
    %v2049 = vld [vmem:[%s5 + $0x58] sm:$0xf]
    %v2050 = vld [vmem:[%s5 + $0x5c] sm:$0xf]
    %v2051 = vld [vmem:[%s5 + $0x60] sm:$0xf]
    %v2052 = vld [vmem:[%s5 + $0x64] sm:$0xf]
    %v2053 = vld [vmem:[%s5 + $0x68] sm:$0xf]
    %v2054 = vld [vmem:[%s5 + $0x6c] sm:$0xf]
    %v2055 = vld [vmem:[%s5 + $0x70] sm:$0xf]
    %v2056 = vld [vmem:[%s5 + $0x74] sm:$0xf]
    %v2057 = vld [vmem:[%s5 + $0x78] sm:$0xf]
    %v2058 = vld [vmem:[%s5 + $0x7c] sm:$0xf]
    %v2059 = vld [vmem:[%s5 + $0x80] sm:$0xf]
    %v2060 = vld [vmem:[%s5 + $0x84] sm:$0xf]
    %v2061 = vld [vmem:[%s5 + $0x88] sm:$0xf]
    %v2062 = vld [vmem:[%s5 + $0x8c] sm:$0xf]
    %v2063 = vld [vmem:[%s5 + $0x90] sm:$0xf]
    %v2064 = vld [vmem:[%s5 + $0x94] sm:$0xf]
    %v2065 = vld [vmem:[%s5 + $0x98] sm:$0xf]
    %v2066 = vld [vmem:[%s5 + $0x9c] sm:$0xf]
    %v2067 = vld [vmem:[%s5 + $0xa0] sm:$0xf]
    %v2068 = vld [vmem:[%s5 + $0xa4] sm:$0xf]
    %v2069 = vld [vmem:[%s5 + $0xa8] sm:$0xf]
    %v2070 = vld [vmem:[%s5 + $0xac] sm:$0xf]
    %v2071 = vld [vmem:[%s5 + $0xb0] sm:$0xf]
    %v2072 = vld [vmem:[%s5 + $0xb4] sm:$0xf]
    %v2073 = vld [vmem:[%s5 + $0xb8] sm:$0xf]
    %v2074 = vld [vmem:[%s5 + $0xbc] sm:$0xf]
    %v2075 = vld [vmem:[%s5 + $0xc0] sm:$0xf]
    %v2076 = vld [vmem:[%s5 + $0xc4] sm:$0xf]
    %v2077 = vld [vmem:[%s5 + $0xc8] sm:$0xf]
    %v2078 = vld [vmem:[%s5 + $0xcc] sm:$0xf]
    %v2079 = vld [vmem:[%s5 + $0xd0] sm:$0xf]
    %v2080 = vld [vmem:[%s5 + $0xd4] sm:$0xf]
    %v2081 = vld [vmem:[%s5 + $0xd8] sm:$0xf]
    %v2082 = vld [vmem:[%s5 + $0xdc] sm:$0xf]
    %v2083 = vld [vmem:[%s5 + $0xe0] sm:$0xf]
    %v2084 = vld [vmem:[%s5 + $0xe4] sm:$0xf]
    %v2085 = vld [vmem:[%s5 + $0xe8] sm:$0xf]
    %v2086 = vld [vmem:[%s5 + $0xec] sm:$0xf]
    %v2087 = vld [vmem:[%s5 + $0xf0] sm:$0xf]
    %v2088 = vld [vmem:[%s5 + $0xf4] sm:$0xf]
    %v2089 = vld [vmem:[%s5 + $0xf8] sm:$0xf]
    %v2090 = vld [vmem:[%s5 + $0xfc] sm:$0xf]
    %v2091 = vld [vmem:[%s6] sm:$0x1]
    %v2093 = vlaneseq
    %v2094 = vshrl.u32 %v2093, 7
    %v2095 = vsub.s32 0, %v2094
    %v2096 = vrot.slane %v2091, %v2095
    %v2162 = vunpack.c.l.b16 %v2027
    %v2163 = vunpack.c.l.b16 %v2028
    %v2164 = vunpack.c.l.b16 %v2029
    %v2165 = vunpack.c.l.b16 %v2030
    %v2166 = vunpack.c.l.b16 %v2031
    %v2167 = vunpack.c.l.b16 %v2032
    %v2168 = vunpack.c.l.b16 %v2033
    %v2169 = vunpack.c.l.b16 %v2034
    %v2170 = vunpack.c.l.b16 %v2035
    %v2171 = vunpack.c.l.b16 %v2036
    %v2172 = vunpack.c.l.b16 %v2037
    %v2173 = vunpack.c.l.b16 %v2038
    %v2174 = vunpack.c.l.b16 %v2039
    %v2175 = vunpack.c.l.b16 %v2040
    %v2176 = vunpack.c.l.b16 %v2041
    %v2177 = vunpack.c.l.b16 %v2042
    %v2178 = vunpack.c.l.b16 %v2043
    %v2179 = vunpack.c.l.b16 %v2044
    %v2180 = vunpack.c.l.b16 %v2045
    %v2181 = vunpack.c.l.b16 %v2046
    %v2182 = vunpack.c.l.b16 %v2047
    %v2183 = vunpack.c.l.b16 %v2048
    %v2184 = vunpack.c.l.b16 %v2049
    %v2185 = vunpack.c.l.b16 %v2050
    %v2186 = vunpack.c.l.b16 %v2051
    %v2187 = vunpack.c.l.b16 %v2052
    %v2188 = vunpack.c.l.b16 %v2053
    %v2189 = vunpack.c.l.b16 %v2054
    %v2190 = vunpack.c.l.b16 %v2055
    %v2191 = vunpack.c.l.b16 %v2056
    %v2192 = vunpack.c.l.b16 %v2057
    %v2193 = vunpack.c.l.b16 %v2058
    %v2194 = vunpack.c.l.b16 %v2059
    %v2195 = vunpack.c.l.b16 %v2060
    %v2196 = vunpack.c.l.b16 %v2061
    %v2197 = vunpack.c.l.b16 %v2062
    %v2198 = vunpack.c.l.b16 %v2063
    %v2199 = vunpack.c.l.b16 %v2064
    %v2200 = vunpack.c.l.b16 %v2065
    %v2201 = vunpack.c.l.b16 %v2066
    %v2202 = vunpack.c.l.b16 %v2067
    %v2203 = vunpack.c.l.b16 %v2068
    %v2204 = vunpack.c.l.b16 %v2069
    %v2205 = vunpack.c.l.b16 %v2070
    %v2206 = vunpack.c.l.b16 %v2071
    %v2207 = vunpack.c.l.b16 %v2072
    %v2208 = vunpack.c.l.b16 %v2073
    %v2209 = vunpack.c.l.b16 %v2074
    %v2210 = vunpack.c.l.b16 %v2075
    %v2211 = vunpack.c.l.b16 %v2076
    %v2212 = vunpack.c.l.b16 %v2077
    %v2213 = vunpack.c.l.b16 %v2078
    %v2214 = vunpack.c.l.b16 %v2079
    %v2215 = vunpack.c.l.b16 %v2080
    %v2216 = vunpack.c.l.b16 %v2081
    %v2217 = vunpack.c.l.b16 %v2082
    %v2218 = vunpack.c.l.b16 %v2083
    %v2219 = vunpack.c.l.b16 %v2084
    %v2220 = vunpack.c.l.b16 %v2085
    %v2221 = vunpack.c.l.b16 %v2086
    %v2222 = vunpack.c.l.b16 %v2087
    %v2223 = vunpack.c.l.b16 %v2088
    %v2224 = vunpack.c.l.b16 %v2089
    %v2225 = vunpack.c.l.b16 %v2090
    %v2226 = vpack.c.b16 %v2163, %v2162
    %v2227 = vpack.c.b16 %v2165, %v2164
    %v2228 = vpack.c.b16 %v2167, %v2166
    %v2229 = vpack.c.b16 %v2169, %v2168
    %v2230 = vpack.c.b16 %v2171, %v2170
    %v2231 = vpack.c.b16 %v2173, %v2172
    %v2232 = vpack.c.b16 %v2175, %v2174
    %v2233 = vpack.c.b16 %v2177, %v2176
    %v2234 = vpack.c.b16 %v2179, %v2178
    %v2235 = vpack.c.b16 %v2181, %v2180
    %v2236 = vpack.c.b16 %v2183, %v2182
    %v2237 = vpack.c.b16 %v2185, %v2184
    %v2238 = vpack.c.b16 %v2187, %v2186
    %v2239 = vpack.c.b16 %v2189, %v2188
    %v2240 = vpack.c.b16 %v2191, %v2190
    %v2241 = vpack.c.b16 %v2193, %v2192
    %v2242 = vpack.c.b16 %v2195, %v2194
    %v2243 = vpack.c.b16 %v2197, %v2196
    %v2244 = vpack.c.b16 %v2199, %v2198
    %v2245 = vpack.c.b16 %v2201, %v2200
    %v2246 = vpack.c.b16 %v2203, %v2202
    %v2247 = vpack.c.b16 %v2205, %v2204
    %v2248 = vpack.c.b16 %v2207, %v2206
    %v2249 = vpack.c.b16 %v2209, %v2208
    %v2250 = vpack.c.b16 %v2211, %v2210
    %v2251 = vpack.c.b16 %v2213, %v2212
    %v2252 = vpack.c.b16 %v2215, %v2214
    %v2253 = vpack.c.b16 %v2217, %v2216
    %v2254 = vpack.c.b16 %v2219, %v2218
    %v2255 = vpack.c.b16 %v2221, %v2220
    %v2256 = vpack.c.b16 %v2223, %v2222
    %v2257 = vpack.c.b16 %v2225, %v2224
    %2290 = vmatprep.subr.bf16.mxu0 0
    %2291 = vmatpush1.bf16.msra.mxu0 %v2226
    %2292 = vmatprep.subr.bf16.mxu0 0
    %2293 = vmatpush1.bf16.msra.mxu0 %v2227
    %2294 = vmatprep.subr.bf16.mxu0 0
    %2295 = vmatpush1.bf16.msra.mxu0 %v2228
    %2296 = vmatprep.subr.bf16.mxu0 0
    %2297 = vmatpush1.bf16.msra.mxu0 %v2229
    %2298 = vmatprep.subr.bf16.mxu0 0
    %2299 = vmatpush1.bf16.msra.mxu0 %v2230
    %2300 = vmatprep.subr.bf16.mxu0 0
    %2301 = vmatpush1.bf16.msra.mxu0 %v2231
    %2302 = vmatprep.subr.bf16.mxu0 0
    %2303 = vmatpush1.bf16.msra.mxu0 %v2232
    %2304 = vmatprep.subr.bf16.mxu0 0
    %2305 = vmatpush1.bf16.msra.mxu0 %v2233
    %2306 = vmatprep.subr.bf16.mxu0 0
    %2307 = vmatpush1.bf16.msra.mxu0 %v2234
    %2308 = vmatprep.subr.bf16.mxu0 0
    %2309 = vmatpush1.bf16.msra.mxu0 %v2235
    %2310 = vmatprep.subr.bf16.mxu0 0
    %2311 = vmatpush1.bf16.msra.mxu0 %v2236
    %2312 = vmatprep.subr.bf16.mxu0 0
    %2313 = vmatpush1.bf16.msra.mxu0 %v2237
    %2314 = vmatprep.subr.bf16.mxu0 0
    %2315 = vmatpush1.bf16.msra.mxu0 %v2238
    %2316 = vmatprep.subr.bf16.mxu0 0
    %2317 = vmatpush1.bf16.msra.mxu0 %v2239
    %2318 = vmatprep.subr.bf16.mxu0 0
    %2319 = vmatpush1.bf16.msra.mxu0 %v2240
    %2320 = vmatprep.subr.bf16.mxu0 0
    %2321 = vmatpush1.bf16.msra.mxu0 %v2241
    %2322 = vmatprep.mubr.bf16.mxu0 %v2024
    %2323 = vmatmul.mubr.bf16.gmra.mrb[0].mxu0 %v2023
    %v2324 = vpop.f32.mrb[0].mxu0
    %v2325 = vadd.f32 %v2096, %v2324
    %v2326 = vpop.f32.mrb[0].mxu0
    %v2327 = vpop.f32.mrb[0].mxu0
    %v2328 = vadd.f32 %v2096, %v2327
    %v2329 = vpop.f32.mrb[0].mxu0
    %2330 = vdwg.mxu0
    %2331 = vmatprep.subr.bf16.mxu0 0
    %2332 = vmatpush1.bf16.msra.mxu0 %v2242
    %2333 = vmatprep.subr.bf16.mxu0 0
    %2334 = vmatpush1.bf16.msra.mxu0 %v2243
    %2335 = vmatprep.subr.bf16.mxu0 0
    %2336 = vmatpush1.bf16.msra.mxu0 %v2244
    %2337 = vmatprep.subr.bf16.mxu0 0
    %2338 = vmatpush1.bf16.msra.mxu0 %v2245
    %2339 = vmatprep.subr.bf16.mxu0 0
    %2340 = vmatpush1.bf16.msra.mxu0 %v2246
    %2341 = vmatprep.subr.bf16.mxu0 0
    %2342 = vmatpush1.bf16.msra.mxu0 %v2247
    %2343 = vmatprep.subr.bf16.mxu0 0
    %2344 = vmatpush1.bf16.msra.mxu0 %v2248
    %2345 = vmatprep.subr.bf16.mxu0 0
    %2346 = vmatpush1.bf16.msra.mxu0 %v2249
    %2347 = vmatprep.subr.bf16.mxu0 0
    %2348 = vmatpush1.bf16.msra.mxu0 %v2250
    %2349 = vmatprep.subr.bf16.mxu0 0
    %2350 = vmatpush1.bf16.msra.mxu0 %v2251
    %2351 = vmatprep.subr.bf16.mxu0 0
    %2352 = vmatpush1.bf16.msra.mxu0 %v2252
    %2353 = vmatprep.subr.bf16.mxu0 0
    %2354 = vmatpush1.bf16.msra.mxu0 %v2253
    %2355 = vmatprep.subr.bf16.mxu0 0
    %2356 = vmatpush1.bf16.msra.mxu0 %v2254
    %2357 = vmatprep.subr.bf16.mxu0 0
    %2358 = vmatpush1.bf16.msra.mxu0 %v2255
    %2359 = vmatprep.subr.bf16.mxu0 0
    %2360 = vmatpush1.bf16.msra.mxu0 %v2256
    %2361 = vmatprep.subr.bf16.mxu0 0
    %2362 = vmatpush1.bf16.msra.mxu0 %v2257
    %2363 = vmatprep.mubr.bf16.mxu0 %v2026
    %2364 = vmatmul.mubr.bf16.gmra.mrb[0].mxu0 %v2025
    %v2365 = vpop.f32.mrb[0].mxu0
    %v2366 = vadd.f32 %v2325, %v2365
    %v2367 = vpop.f32.mrb[0].mxu0
    %v2368 = vpop.f32.mrb[0].mxu0
    %v2369 = vadd.f32 %v2328, %v2368
    %v2370 = vpop.f32.mrb[0].mxu0
    %2371 = vdwg.mxu0
    %v2372 = vpack.c.bf16 %v2369, %v2366
    %v2374 = vunpack.c.l.b16 %v2372
    %v2375 = vunpack.c.h.b16 %v2372
    %v2376 = vpack.c.b16 %v2374, %v2374
    %v2377 = vpack.c.b16 %v2375, %v2375
    %2380 = vst [vmem:[%s7] sm:$0xf] %v2376
    %2381 = vst [vmem:[%s7 + $0x4] sm:$0xf] %v2377
    // Predicated region
    $region38: #{baseline_net_forward.1} parent=1 // pred_check
      _
    $region39: #{baseline_net_forward.1} parent=1 // pred_check_branch
      %2383 = sbr.rel (0) target = $region41
    $region40: #{baseline_net_forward.1} parent=1 // pred_region
      _
    $region41: #{baseline_net_forward.1} parent=1 // pred_fallthru
      _
    // Predicated region
    $region42: #{baseline_net_forward.1} parent=1 // pred_check
      _
    $region43: #{baseline_net_forward.1} parent=1 // pred_check_branch
      %2385 = sbr.rel (0) target = $region45
    $region44: #{baseline_net_forward.1} parent=1 // pred_region
      _
    $region45: #{baseline_net_forward.1} parent=1 // pred_fallthru
      _
    %2386 = vsyncpa [#allocation3], 1
    %2387 = vsyncpa [#allocation5], 1

</llo_original>
